<compile_context>
chip_gen: v7x
topology: tpu7x:2x2x1
jax: 0.10.0
libtpu: 0.0.40
codegen_flags: <defaults>
</compile_context>

<pallas_src>
import math
import jax
import jax.numpy as jnp
from jax.experimental import pallas as pl
from jax.experimental.pallas import tpu as pltpu

# ----------------------------- small config -----------------------------
MAX_SEQ    = 32
SEQ        = 8            # ids_len
NUM_HEADS  = 4
NUM_KV     = 2
HEAD_DIM   = 16
HIDDEN     = NUM_HEADS * HEAD_DIM          # o_proj.in_features
GROUPS     = NUM_HEADS // NUM_KV
INTER      = 128
VOCAB      = 256
LAYERS     = 2
EPS        = 1e-6
ROPE_THETA_GLOBAL = 1_000_000.0
ROPE_THETA_LOCAL  = 10_000.0
IS_SLIDING = [True, False]                 # per-layer local/global rope choice

Q_OUT   = NUM_HEADS * HEAD_DIM             # 64
KV_OUT  = NUM_KV * HEAD_DIM                # 32
QKV_OUT = Q_OUT + 2 * KV_OUT               # 128  (lane-dense)

# ----------------------------- in-kernel helpers -----------------------------

def _rms(x):
    # x * rsqrt(mean(x^2) + eps)  -- rsqrt goes to the EUP slot
    return x * jax.lax.rsqrt(jnp.mean(x * x, axis=-1, keepdims=True) + EPS)


def _rotate_half(x):
    half = x.shape[-1] // 2
    x1 = x[:, :half]
    x2 = x[:, half:]
    return jnp.concatenate((-x2, x1), axis=-1)


def _gelu_tanh(g):
    # gelu_pytorch_tanh
    return 0.5 * g * (1.0 + jnp.tanh(0.7978845608028654 * (g + 0.044715 * g * g * g)))


# ----------------------------- fused layer kernel -----------------------------

def _layer_kernel(hs_ref, in_ln_ref, wqkv_ref, qn_ref, kn_ref, cos_ref, sin_ref,
                  mask_ref, wo_ref, pa_ln_ref, pf_ln_ref, wgu_ref, wd_ref, po_ln_ref,
                  hs_out_ref, k_out_ref, v_out_ref):
    hs = hs_ref[...]                                           # (S, H) f32

    # ---- attention block ----
    xn = _rms(hs) * in_ln_ref[...]                             # (S, H)
    qkv = jnp.dot(xn.astype(jnp.bfloat16), wqkv_ref[...],
                  preferred_element_type=jnp.float32)          # (S, 128) f32

    cos = cos_ref[...]                                         # (S, D)
    sin = sin_ref[...]
    qn = qn_ref[...]                                           # (1, D)  (already * head_dim^-0.25)
    kn = kn_ref[...]

    q_all = qkv[:, :Q_OUT]
    k_all = qkv[:, Q_OUT:Q_OUT + KV_OUT]
    v_all = qkv[:, Q_OUT + KV_OUT:]

    # per-KV-head: k-norm + RoPE; keep raw v.  Also write the KV cache outputs.
    k_heads = []
    v_heads = []
    for kv in range(NUM_KV):
        kh = k_all[:, kv * HEAD_DIM:(kv + 1) * HEAD_DIM]       # (S, D)
        kh = _rms(kh) * kn
        kh = kh * cos + _rotate_half(kh) * sin
        vh = v_all[:, kv * HEAD_DIM:(kv + 1) * HEAD_DIM]       # (S, D)
        k_heads.append(kh)
        v_heads.append(vh)
        k_out_ref[kv] = kh                                     # (S, D)  (transposed outside)
        v_out_ref[kv] = vh

    mask = mask_ref[...]                                       # (S, S)
    ctx = []
    for h in range(NUM_HEADS):
        qh = q_all[:, h * HEAD_DIM:(h + 1) * HEAD_DIM]         # (S, D)
        qh = _rms(qh) * qn
        qh = qh * cos + _rotate_half(qh) * sin
        kh = k_heads[h // GROUPS]                              # GQA: no repeat copy
        vh = v_heads[h // GROUPS]
        s = jax.lax.dot_general(qh, kh,
                                dimension_numbers=(((1,), (1,)), ((), ())),
                                preferred_element_type=jnp.float32) + mask   # (S, S)
        s = s - jnp.max(s, axis=-1, keepdims=True)
        p = jnp.exp(s)
        p = p * pl.reciprocal(jnp.sum(p, axis=-1, keepdims=True), approx=True)
        ctx.append(jnp.dot(p, vh, preferred_element_type=jnp.float32))       # (S, D)

    attn = jnp.concatenate(ctx, axis=-1)                       # (S, H)
    attn_out = jnp.dot(attn.astype(jnp.bfloat16), wo_ref[...],
                       preferred_element_type=jnp.float32)     # (S, H)
    hs = hs + _rms(attn_out) * pa_ln_ref[...]

    # ---- MLP block ----
    xn2 = _rms(hs) * pf_ln_ref[...]
    gu = jnp.dot(xn2.astype(jnp.bfloat16), wgu_ref[...],
                 preferred_element_type=jnp.float32)           # (S, 2*I)
    g = _gelu_tanh(gu[:, :INTER])
    u = gu[:, INTER:]
    ff = jnp.dot((g * u).astype(jnp.bfloat16), wd_ref[...],
                 preferred_element_type=jnp.float32)           # (S, H)
    hs_out_ref[...] = hs + _rms(ff) * po_ln_ref[...]


def gemma_layer(hs, lp, cos, sin, mask):
    """One fused decoder layer.  hs: (S, H) f32 -> (hs', k_new, v_new)."""
    S = hs.shape[0]
    return pl.pallas_call(
        _layer_kernel,
        out_shape=(jax.ShapeDtypeStruct((S, HIDDEN), jnp.float32),
                   jax.ShapeDtypeStruct((NUM_KV, S, HEAD_DIM), jnp.float32),
                   jax.ShapeDtypeStruct((NUM_KV, S, HEAD_DIM), jnp.float32)),
        grid=(1,),
        in_specs=[
            pl.BlockSpec((S, HIDDEN), lambda i: (0, 0)),           # hs
            pl.BlockSpec((1, HIDDEN), lambda i: (0, 0)),           # input_ln
            pl.BlockSpec((HIDDEN, QKV_OUT), lambda i: (0, 0)),     # wqkv (bf16)
            pl.BlockSpec((1, HEAD_DIM), lambda i: (0, 0)),         # q_norm
            pl.BlockSpec((1, HEAD_DIM), lambda i: (0, 0)),         # k_norm
            pl.BlockSpec((S, HEAD_DIM), lambda i: (0, 0)),         # cos
            pl.BlockSpec((S, HEAD_DIM), lambda i: (0, 0)),         # sin
            pl.BlockSpec((S, S), lambda i: (0, 0)),                # mask
            pl.BlockSpec((HIDDEN, HIDDEN), lambda i: (0, 0)),      # wo (bf16)
            pl.BlockSpec((1, HIDDEN), lambda i: (0, 0)),           # post_attn_ln
            pl.BlockSpec((1, HIDDEN), lambda i: (0, 0)),           # pre_ff_ln
            pl.BlockSpec((HIDDEN, 2 * INTER), lambda i: (0, 0)),   # wgu (bf16)
            pl.BlockSpec((INTER, HIDDEN), lambda i: (0, 0)),       # wd (bf16)
            pl.BlockSpec((1, HIDDEN), lambda i: (0, 0)),           # post_ff_ln
        ],
        out_specs=(pl.BlockSpec((S, HIDDEN), lambda i: (0, 0)),
                   pl.BlockSpec((NUM_KV, S, HEAD_DIM), lambda i: (0, 0, 0)),
                   pl.BlockSpec((NUM_KV, S, HEAD_DIM), lambda i: (0, 0, 0))),
        compiler_params=pltpu.CompilerParams(
            dimension_semantics=("arbitrary",),
            vmem_limit_bytes=32 * 1024 * 1024),
    )(hs, lp['input_ln'], lp['wqkv_T'], lp['q_norm'], lp['k_norm'],
      cos, sin, mask, lp['wo_T'], lp['post_attn_ln'], lp['pre_ff_ln'],
      lp['wgu_T'], lp['wd_T'], lp['post_ff_ln'])


# ----------------------------- fused final-norm + lm_head -----------------------------

def _head_kernel(x_ref, wn_ref, wl_ref, o_ref):
    x = x_ref[...]                                             # (1, H)
    xn = _rms(x) * wn_ref[...]
    o_ref[...] = jnp.dot(xn.astype(jnp.bfloat16), wl_ref[...],
                         preferred_element_type=jnp.float32)   # (1, V) lane-dense


def lm_head_call(x, wn, wl):
    return pl.pallas_call(
        _head_kernel,
        out_shape=jax.ShapeDtypeStruct((1, VOCAB), jnp.float32),
        grid=(1,),
        in_specs=[pl.BlockSpec((1, HIDDEN), lambda i: (0, 0)),
                  pl.BlockSpec((1, HIDDEN), lambda i: (0, 0)),
                  pl.BlockSpec((HIDDEN, VOCAB), lambda i: (0, 0))],
        out_specs=pl.BlockSpec((1, VOCAB), lambda i: (0, 0)),
        compiler_params=pltpu.CompilerParams(dimension_semantics=("arbitrary",)),
    )(x, wn, wl)


# ----------------------------- params -----------------------------

def make_rope_tables(theta_base):
    pos = jnp.arange(MAX_SEQ, dtype=jnp.float32)[:, None]
    hdr = -(jnp.arange(0, HEAD_DIM, 2, dtype=jnp.float32) / HEAD_DIM)
    theta = theta_base ** hdr
    idx = pos * theta
    cos = jnp.concatenate([jnp.cos(idx), jnp.cos(idx)], axis=-1)[None]
    sin = jnp.concatenate([jnp.sin(idx), jnp.sin(idx)], axis=-1)[None]
    # matches .half() in the reference __init__
    return cos.astype(jnp.float16), sin.astype(jnp.float16)


def init_params(key):
    scale_factor = math.pow(HEAD_DIM, -0.25)
    keys = jax.random.split(key, 4 + LAYERS)
    p = {}

    # embedding + per-row uint8 quantization (mirrors the module __init__)
    emb = 0.02 * jax.random.normal(keys[0], (VOCAB, HIDDEN), jnp.float32)
    embed_scale = float(HIDDEN) ** 0.5
    data = emb * embed_scale
    zero_point = jnp.min(data, axis=1, keepdims=True)
    scale = ((jnp.max(data, axis=1) - zero_point[:, 0]) / 255.0)[:, None]
    embed_q = jnp.clip(jnp.round((data - zero_point) / scale), 0, 255).astype(jnp.uint8)
    p['embed_q'], p['scale'], p['zero_point'] = embed_q, scale, zero_point

    p['cos_g'], p['sin_g'] = make_rope_tables(ROPE_THETA_GLOBAL)
    p['cos_l'], p['sin_l'] = make_rope_tables(ROPE_THETA_LOCAL)

    p['final_norm'] = (1.0 + 0.02 * jax.random.normal(keys[1], (HIDDEN,), jnp.float32)).reshape(1, HIDDEN)
    lm_head = 0.02 * jax.random.normal(keys[2], (VOCAB, HIDDEN), jnp.float32)
    p['lm_head_T'] = lm_head.T.astype(jnp.bfloat16)            # (H, V), pre-transposed / bf16

    tri = jnp.tril(jnp.ones((1, MAX_SEQ, MAX_SEQ), dtype=jnp.int8))
    p['attn_mask'] = ((1 - tri) * (-128)).astype(jnp.int8)

    layers = []
    for i in range(LAYERS):
        lk = jax.random.split(keys[4 + i], 12)
        n = lambda k, shp: 0.02 * jax.random.normal(k, shp, jnp.float32)
        wq = n(lk[6], (NUM_HEADS * HEAD_DIM, HIDDEN))           # torch (out, in)
        wk = n(lk[7], (NUM_KV * HEAD_DIM, HIDDEN))
        wv = n(lk[8], (NUM_KV * HEAD_DIM, HIDDEN))
        wo = n(lk[9], (HIDDEN, NUM_HEADS * HEAD_DIM))
        wg = n(lk[10], (INTER, HIDDEN))
        wu = n(lk[11], (INTER, HIDDEN))
        wd = n(jax.random.fold_in(lk[11], 1), (HIDDEN, INTER))
        layers.append(dict(
            input_ln=(1.0 + n(lk[0], (HIDDEN,))).reshape(1, HIDDEN),
            post_attn_ln=(1.0 + n(lk[1], (HIDDEN,))).reshape(1, HIDDEN),
            pre_ff_ln=(1.0 + n(lk[2], (HIDDEN,))).reshape(1, HIDDEN),
            post_ff_ln=(1.0 + n(lk[3], (HIDDEN,))).reshape(1, HIDDEN),
            q_norm=((1.0 + n(lk[4], (HEAD_DIM,))) * scale_factor).reshape(1, HEAD_DIM),
            k_norm=((1.0 + n(lk[5], (HEAD_DIM,))) * scale_factor).reshape(1, HEAD_DIM),
            # fused + pre-transposed + bf16-cast MXU weights
            wqkv_T=jnp.concatenate([wq, wk, wv], axis=0).T.astype(jnp.bfloat16),   # (H, 128)
            wo_T=wo.T.astype(jnp.bfloat16),                                        # (H, H)
            wgu_T=jnp.concatenate([wg, wu], axis=0).T.astype(jnp.bfloat16),        # (H, 256)
            wd_T=wd.T.astype(jnp.bfloat16),                                        # (I, H)
        ))
    p['layers'] = layers
    return p


# ----------------------------- forward -----------------------------

def _forward(params, input_ids, attn_flag):
    S = input_ids.shape[-1]
    history_len = 0
    kv_seq_len = S + history_len
    # TODO(synk): history_len > 0 (KV-cache append path) not exercised; prompt pass only.

    ids = input_ids[0]
    # embedding dequantization: uint8 * scale + zero_point  -> (S, H)
    hs = (params['embed_q'][ids].astype(jnp.float32)
          * params['scale'][ids] + params['zero_point'][ids])

    mask = (params['attn_mask'][0, :S, :kv_seq_len].astype(jnp.float32)
            * attn_flag.astype(jnp.float32))                   # (S, S)

    cos_g = params['cos_g'][0, history_len:kv_seq_len].astype(jnp.float32)   # (S, D)
    sin_g = params['sin_g'][0, history_len:kv_seq_len].astype(jnp.float32)
    cos_l = params['cos_l'][0, history_len:kv_seq_len].astype(jnp.float32)
    sin_l = params['sin_l'][0, history_len:kv_seq_len].astype(jnp.float32)

    # empty KV caches (history_len = 0)
    k_empty = jnp.zeros((NUM_KV, 1, HEAD_DIM, 0), jnp.float32)
    v_empty = jnp.zeros((NUM_KV, 1, 0, HEAD_DIM), jnp.float32)

    save_key, save_value = [], []
    for i in range(LAYERS):
        lp = params['layers'][i]
        if IS_SLIDING[i]:
            cos, sin = cos_l, sin_l
        else:
            cos, sin = cos_g, sin_g
        hs, k_new, v_new = gemma_layer(hs, lp, cos, sin, mask)
        k_t = jnp.transpose(k_new, (0, 2, 1))[:, None]          # (NKV, 1, D, S)
        v_t = v_new[:, None]                                    # (NKV, 1, S, D)
        save_key.append(jnp.concatenate((k_empty, k_t), axis=-1))
        save_value.append(jnp.concatenate((v_empty, v_t), axis=2))

    logits = lm_head_call(hs[-1:], params['final_norm'], params['lm_head_T'])  # (1, V)
    token = jnp.argmax(logits, axis=-1, keepdims=True).astype(jnp.int32)
    return save_key, save_value, token, jnp.array([kv_seq_len], jnp.int32)


forward = jax.jit(_forward)


if __name__ == "__main__":
    key = jax.random.PRNGKey(0)
    params = init_params(key)
    input_ids = jax.random.randint(jax.random.fold_in(key, 7), (1, SEQ), 0, VOCAB, dtype=jnp.int32)

    save_k, save_v, token, kv_len = forward(params, input_ids, jnp.int8(1))
    jax.block_until_ready(token)
    jax.block_until_ready(save_k[-1])
    jax.block_until_ready(save_v[-1])

    assert token.shape == (1, 1)
    assert save_k[0].shape == (NUM_KV, 1, HEAD_DIM, SEQ)
    assert save_v[0].shape == (NUM_KV, 1, SEQ, HEAD_DIM)
    print("KERNEL_OK")
</pallas_src>

<mosaic_0001>
module attributes {stable_mosaic.version = 11 : i64} {
  func.func @_head_kernel(%arg0: i32, %arg1: memref<1x64xf32, #tpu.memory_space<vmem>>, %arg2: memref<1x64xf32, #tpu.memory_space<vmem>>, %arg3: memref<64x256xbf16, #tpu.memory_space<vmem>>, %arg4: memref<1x256xf32, #tpu.memory_space<vmem>>) attributes {dimension_semantics = [#tpu.dimension_semantics<arbitrary>], iteration_bounds = array<i64: 1>, scalar_prefetch = 0 : i64, scratch_operands = 0 : i64, tpu.core_type = #tpu.core_type<tc>, window_params = [{pipeline_mode = #tpu.pipeline_mode<synchronous>, transform_indices = @transform_0, window_bounds = array<i64: 1, 64>}, {pipeline_mode = #tpu.pipeline_mode<synchronous>, transform_indices = @transform_1, window_bounds = array<i64: 1, 64>}, {pipeline_mode = #tpu.pipeline_mode<synchronous>, transform_indices = @transform_2, window_bounds = array<i64: 64, 256>}, {pipeline_mode = #tpu.pipeline_mode<synchronous>, transform_indices = @transform_3, window_bounds = array<i64: 1, 256>}]} {
    %c0 = arith.constant 0 : index
    %c0_0 = arith.constant 0 : index
    %0 = vector.load %arg1[%c0, %c0_0] : memref<1x64xf32, #tpu.memory_space<vmem>>, vector<1x64xf32>
    %1 = arith.mulf %0, %0 : vector<1x64xf32>
    %cst = arith.constant dense<0.000000e+00> : vector<1xf32>
    %2 = vector.multi_reduction <add>, %1, %cst [1] : vector<1x64xf32> to vector<1xf32>
    %3 = vector.shape_cast %2 : vector<1xf32> to vector<1x1xf32>
    %cst_1 = arith.constant 6.400000e+01 : f32
    %4 = vector.broadcast %cst_1 : f32 to vector<1x1xf32>
    %5 = arith.divf %3, %4 : vector<1x1xf32>
    %cst_2 = arith.constant 9.99999997E-7 : f32
    %6 = vector.broadcast %cst_2 : f32 to vector<1x1xf32>
    %7 = arith.addf %5, %6 : vector<1x1xf32>
    %8 = math.rsqrt %7 : vector<1x1xf32>
    %9 = vector.broadcast %8 : vector<1x1xf32> to vector<1x64xf32>
    %10 = arith.mulf %0, %9 : vector<1x64xf32>
    %c0_3 = arith.constant 0 : index
    %c0_4 = arith.constant 0 : index
    %11 = vector.load %arg2[%c0_3, %c0_4] : memref<1x64xf32, #tpu.memory_space<vmem>>, vector<1x64xf32>
    %12 = arith.mulf %10, %11 : vector<1x64xf32>
    %13 = arith.truncf %12 : vector<1x64xf32> to vector<1x64xbf16>
    %c0_5 = arith.constant 0 : index
    %c0_6 = arith.constant 0 : index
    %14 = vector.load %arg3[%c0_5, %c0_6] : memref<64x256xbf16, #tpu.memory_space<vmem>>, vector<64x256xbf16>
    %cst_7 = arith.constant dense<0.000000e+00> : vector<1x256xf32>
    %15 = tpu.matmul %13, %14, %cst_7 {dimension_numbers = #tpu.dot_dimension_numbers<[1], [0], [0], [1], [0, 0, 1, 1], [], []>} : vector<1x64xbf16>, vector<64x256xbf16>, vector<1x256xf32> -> vector<1x256xf32>
    %c0_8 = arith.constant 0 : index
    %c0_9 = arith.constant 0 : index
    %16 = vector.load %arg4[%c0_8, %c0_9] : memref<1x256xf32, #tpu.memory_space<vmem>>, vector<1x256xf32>
    tpu.vector_store %arg4[%c0_8, %c0_9], %15 {strides = array<i32>} : memref<1x256xf32, #tpu.memory_space<vmem>>, vector<1x256xf32>,
    return
  }
  func.func @transform_0(%arg0: i32) -> (i32, i32) {
    %c0_i32 = arith.constant 0 : i32
    %c0_i32_0 = arith.constant 0 : i32
    %c0_i32_1 = arith.constant 0 : i32
    return %c0_i32, %c0_i32_0 : i32, i32
  }
  func.func @transform_1(%arg0: i32) -> (i32, i32) {
    %c0_i32 = arith.constant 0 : i32
    %c0_i32_0 = arith.constant 0 : i32
    %c0_i32_1 = arith.constant 0 : i32
    return %c0_i32, %c0_i32_0 : i32, i32
  }
  func.func @transform_2(%arg0: i32) -> (i32, i32) {
    %c0_i32 = arith.constant 0 : i32
    %c0_i32_0 = arith.constant 0 : i32
    %c0_i32_1 = arith.constant 0 : i32
    return %c0_i32, %c0_i32_0 : i32, i32
  }
  func.func @transform_3(%arg0: i32) -> (i32, i32) {
    %c0_i32 = arith.constant 0 : i32
    %c0_i32_0 = arith.constant 0 : i32
    %c0_i32_1 = arith.constant 0 : i32
    return %c0_i32, %c0_i32_0 : i32, i32
  }
}

module attributes {stable_mosaic.version = 11 : i64} {
  func.func @_layer_kernel(%arg0: i32, %arg1: memref<8x64xf32, #tpu.memory_space<vmem>>, %arg2: memref<1x64xf32, #tpu.memory_space<vmem>>, %arg3: memref<64x128xbf16, #tpu.memory_space<vmem>>, %arg4: memref<1x16xf32, #tpu.memory_space<vmem>>, %arg5: memref<1x16xf32, #tpu.memory_space<vmem>>, %arg6: memref<8x16xf32, #tpu.memory_space<vmem>>, %arg7: memref<8x16xf32, #tpu.memory_space<vmem>>, %arg8: memref<8x8xf32, #tpu.memory_space<vmem>>, %arg9: memref<64x64xbf16, #tpu.memory_space<vmem>>, %arg10: memref<1x64xf32, #tpu.memory_space<vmem>>, %arg11: memref<1x64xf32, #tpu.memory_space<vmem>>, %arg12: memref<64x256xbf16, #tpu.memory_space<vmem>>, %arg13: memref<128x64xbf16, #tpu.memory_space<vmem>>, %arg14: memref<1x64xf32, #tpu.memory_space<vmem>>, %arg15: memref<8x64xf32, #tpu.memory_space<vmem>>, %arg16: memref<2x8x16xf32, #tpu.memory_space<vmem>>, %arg17: memref<2x8x16xf32, #tpu.memory_space<vmem>>) attributes {dimension_semantics = [#tpu.dimension_semantics<arbitrary>], iteration_bounds = array<i64: 1>, scalar_prefetch = 0 : i64, scratch_operands = 0 : i64, tpu.core_type = #tpu.core_type<tc>, window_params = [{pipeline_mode = #tpu.pipeline_mode<synchronous>, transform_indices = @transform_0, window_bounds = array<i64: 8, 64>}, {pipeline_mode = #tpu.pipeline_mode<synchronous>, transform_indices = @transform_1, window_bounds = array<i64: 1, 64>}, {pipeline_mode = #tpu.pipeline_mode<synchronous>, transform_indices = @transform_2, window_bounds = array<i64: 64, 128>}, {pipeline_mode = #tpu.pipeline_mode<synchronous>, transform_indices = @transform_3, window_bounds = array<i64: 1, 16>}, {pipeline_mode = #tpu.pipeline_mode<synchronous>, transform_indices = @transform_4, window_bounds = array<i64: 1, 16>}, {pipeline_mode = #tpu.pipeline_mode<synchronous>, transform_indices = @transform_5, window_bounds = array<i64: 8, 16>}, {pipeline_mode = #tpu.pipeline_mode<synchronous>, transform_indices = @transform_6, window_bounds = array<i64: 8, 16>}, {pipeline_mode = #tpu.pipeline_mode<synchronous>, transform_indices = @transform_7, window_bounds = array<i64: 8, 8>}, {pipeline_mode = #tpu.pipeline_mode<synchronous>, transform_indices = @transform_8, window_bounds = array<i64: 64, 64>}, {pipeline_mode = #tpu.pipeline_mode<synchronous>, transform_indices = @transform_9, window_bounds = array<i64: 1, 64>}, {pipeline_mode = #tpu.pipeline_mode<synchronous>, transform_indices = @transform_10, window_bounds = array<i64: 1, 64>}, {pipeline_mode = #tpu.pipeline_mode<synchronous>, transform_indices = @transform_11, window_bounds = array<i64: 64, 256>}, {pipeline_mode = #tpu.pipeline_mode<synchronous>, transform_indices = @transform_12, window_bounds = array<i64: 128, 64>}, {pipeline_mode = #tpu.pipeline_mode<synchronous>, transform_indices = @transform_13, window_bounds = array<i64: 1, 64>}, {pipeline_mode = #tpu.pipeline_mode<synchronous>, transform_indices = @transform_14, window_bounds = array<i64: 8, 64>}, {pipeline_mode = #tpu.pipeline_mode<synchronous>, transform_indices = @transform_15, window_bounds = array<i64: 2, 8, 16>}, {pipeline_mode = #tpu.pipeline_mode<synchronous>, transform_indices = @transform_16, window_bounds = array<i64: 2, 8, 16>}]} {
    %c0 = arith.constant 0 : index
    %c0_0 = arith.constant 0 : index
    %0 = vector.load %arg1[%c0, %c0_0] : memref<8x64xf32, #tpu.memory_space<vmem>>, vector<8x64xf32>
    %1 = arith.mulf %0, %0 : vector<8x64xf32>
    %cst = arith.constant dense<0.000000e+00> : vector<8xf32>
    %2 = vector.multi_reduction <add>, %1, %cst [1] : vector<8x64xf32> to vector<8xf32>
    %3 = vector.shape_cast %2 : vector<8xf32> to vector<8x1xf32>
    %cst_1 = arith.constant 6.400000e+01 : f32
    %4 = vector.broadcast %cst_1 : f32 to vector<8x1xf32>
    %5 = arith.divf %3, %4 : vector<8x1xf32>
    %cst_2 = arith.constant 9.99999997E-7 : f32
    %6 = vector.broadcast %cst_2 : f32 to vector<8x1xf32>
    %7 = arith.addf %5, %6 : vector<8x1xf32>
    %8 = math.rsqrt %7 : vector<8x1xf32>
    %9 = vector.broadcast %8 : vector<8x1xf32> to vector<8x64xf32>
    %10 = arith.mulf %0, %9 : vector<8x64xf32>
    %c0_3 = arith.constant 0 : index
    %c0_4 = arith.constant 0 : index
    %11 = vector.load %arg2[%c0_3, %c0_4] : memref<1x64xf32, #tpu.memory_space<vmem>>, vector<1x64xf32>
    %12 = vector.broadcast %11 : vector<1x64xf32> to vector<8x64xf32>
    %13 = arith.mulf %10, %12 : vector<8x64xf32>
    %14 = arith.truncf %13 : vector<8x64xf32> to vector<8x64xbf16>
    %c0_5 = arith.constant 0 : index
    %c0_6 = arith.constant 0 : index
    %15 = vector.load %arg3[%c0_5, %c0_6] : memref<64x128xbf16, #tpu.memory_space<vmem>>, vector<64x128xbf16>
    %cst_7 = arith.constant dense<0.000000e+00> : vector<8x128xf32>
    %16 = tpu.matmul %14, %15, %cst_7 {dimension_numbers = #tpu.dot_dimension_numbers<[1], [0], [0], [1], [0, 0, 1, 1], [], []>} : vector<8x64xbf16>, vector<64x128xbf16>, vector<8x128xf32> -> vector<8x128xf32>
    %c0_8 = arith.constant 0 : index
    %c0_9 = arith.constant 0 : index
    %17 = vector.load %arg6[%c0_8, %c0_9] : memref<8x16xf32, #tpu.memory_space<vmem>>, vector<8x16xf32>
    %c0_10 = arith.constant 0 : index
    %c0_11 = arith.constant 0 : index
    %18 = vector.load %arg7[%c0_10, %c0_11] : memref<8x16xf32, #tpu.memory_space<vmem>>, vector<8x16xf32>
    %c0_12 = arith.constant 0 : index
    %c0_13 = arith.constant 0 : index
    %19 = vector.load %arg4[%c0_12, %c0_13] : memref<1x16xf32, #tpu.memory_space<vmem>>, vector<1x16xf32>
    %c0_14 = arith.constant 0 : index
    %c0_15 = arith.constant 0 : index
    %20 = vector.load %arg5[%c0_14, %c0_15] : memref<1x16xf32, #tpu.memory_space<vmem>>, vector<1x16xf32>
    %21 = vector.extract_strided_slice %16 {offsets = [0, 0], sizes = [8, 64], strides = [1, 1]} : vector<8x128xf32> to vector<8x64xf32>
    %22 = vector.extract_strided_slice %16 {offsets = [0, 64], sizes = [8, 32], strides = [1, 1]} : vector<8x128xf32> to vector<8x32xf32>
    %23 = vector.extract_strided_slice %16 {offsets = [0, 96], sizes = [8, 32], strides = [1, 1]} : vector<8x128xf32> to vector<8x32xf32>
    %24 = vector.extract_strided_slice %22 {offsets = [0, 0], sizes = [8, 16], strides = [1, 1]} : vector<8x32xf32> to vector<8x16xf32>
    %25 = arith.mulf %24, %24 : vector<8x16xf32>
    %cst_16 = arith.constant dense<0.000000e+00> : vector<8xf32>
    %26 = vector.multi_reduction <add>, %25, %cst_16 [1] : vector<8x16xf32> to vector<8xf32>
    %27 = vector.shape_cast %26 : vector<8xf32> to vector<8x1xf32>
    %cst_17 = arith.constant 1.600000e+01 : f32
    %28 = vector.broadcast %cst_17 : f32 to vector<8x1xf32>
    %29 = arith.divf %27, %28 : vector<8x1xf32>
    %cst_18 = arith.constant 9.99999997E-7 : f32
    %30 = vector.broadcast %cst_18 : f32 to vector<8x1xf32>
    %31 = arith.addf %29, %30 : vector<8x1xf32>
    %32 = math.rsqrt %31 : vector<8x1xf32>
    %33 = vector.broadcast %32 : vector<8x1xf32> to vector<8x16xf32>
    %34 = arith.mulf %24, %33 : vector<8x16xf32>
    %35 = vector.broadcast %20 : vector<1x16xf32> to vector<8x16xf32>
    %36 = arith.mulf %34, %35 : vector<8x16xf32>
    %37 = arith.mulf %36, %17 : vector<8x16xf32>
    %38 = vector.extract_strided_slice %36 {offsets = [0, 0], sizes = [8, 8], strides = [1, 1]} : vector<8x16xf32> to vector<8x8xf32>
    %39 = vector.extract_strided_slice %36 {offsets = [0, 8], sizes = [8, 8], strides = [1, 1]} : vector<8x16xf32> to vector<8x8xf32>
    %cst_19 = arith.constant 0.000000e+00 : f32
    %40 = vector.broadcast %cst_19 : f32 to vector<8x8xf32>
    %41 = arith.subf %40, %39 : vector<8x8xf32>
    %42 = tpu.concatenate %41, %38 in 1 : vector<8x8xf32>, vector<8x8xf32> -> vector<8x16xf32>
    %43 = arith.mulf %42, %18 : vector<8x16xf32>
    %44 = arith.addf %37, %43 : vector<8x16xf32>
    %45 = vector.extract_strided_slice %23 {offsets = [0, 0], sizes = [8, 16], strides = [1, 1]} : vector<8x32xf32> to vector<8x16xf32>
    %c0_20 = arith.constant 0 : index
    %c0_21 = arith.constant 0 : index
    %c0_22 = arith.constant 0 : index
    %46 = vector.load %arg16[%c0_20, %c0_21, %c0_22] : memref<2x8x16xf32, #tpu.memory_space<vmem>>, vector<1x8x16xf32>
    %47 = vector.shape_cast %46 : vector<1x8x16xf32> to vector<8x16xf32>
    %48 = vector.shape_cast %44 : vector<8x16xf32> to vector<1x8x16xf32>
    tpu.vector_store %arg16[%c0_20, %c0_21, %c0_22], %48 {strides = array<i32>} : memref<2x8x16xf32, #tpu.memory_space<vmem>>, vector<1x8x16xf32>,
    %c0_23 = arith.constant 0 : index
    %c0_24 = arith.constant 0 : index
    %c0_25 = arith.constant 0 : index
    %49 = vector.load %arg17[%c0_23, %c0_24, %c0_25] : memref<2x8x16xf32, #tpu.memory_space<vmem>>, vector<1x8x16xf32>
    %50 = vector.shape_cast %49 : vector<1x8x16xf32> to vector<8x16xf32>
    %51 = vector.shape_cast %45 : vector<8x16xf32> to vector<1x8x16xf32>
    tpu.vector_store %arg17[%c0_23, %c0_24, %c0_25], %51 {strides = array<i32>} : memref<2x8x16xf32, #tpu.memory_space<vmem>>, vector<1x8x16xf32>,
    %52 = vector.extract_strided_slice %22 {offsets = [0, 16], sizes = [8, 16], strides = [1, 1]} : vector<8x32xf32> to vector<8x16xf32>
    %53 = arith.mulf %52, %52 : vector<8x16xf32>
    %cst_26 = arith.constant dense<0.000000e+00> : vector<8xf32>
    %54 = vector.multi_reduction <add>, %53, %cst_26 [1] : vector<8x16xf32> to vector<8xf32>
    %55 = vector.shape_cast %54 : vector<8xf32> to vector<8x1xf32>
    %cst_27 = arith.constant 1.600000e+01 : f32
    %56 = vector.broadcast %cst_27 : f32 to vector<8x1xf32>
    %57 = arith.divf %55, %56 : vector<8x1xf32>
    %cst_28 = arith.constant 9.99999997E-7 : f32
    %58 = vector.broadcast %cst_28 : f32 to vector<8x1xf32>
    %59 = arith.addf %57, %58 : vector<8x1xf32>
    %60 = math.rsqrt %59 : vector<8x1xf32>
    %61 = vector.broadcast %60 : vector<8x1xf32> to vector<8x16xf32>
    %62 = arith.mulf %52, %61 : vector<8x16xf32>
    %63 = vector.broadcast %20 : vector<1x16xf32> to vector<8x16xf32>
    %64 = arith.mulf %62, %63 : vector<8x16xf32>
    %65 = arith.mulf %64, %17 : vector<8x16xf32>
    %66 = vector.extract_strided_slice %64 {offsets = [0, 0], sizes = [8, 8], strides = [1, 1]} : vector<8x16xf32> to vector<8x8xf32>
    %67 = vector.extract_strided_slice %64 {offsets = [0, 8], sizes = [8, 8], strides = [1, 1]} : vector<8x16xf32> to vector<8x8xf32>
    %cst_29 = arith.constant 0.000000e+00 : f32
    %68 = vector.broadcast %cst_29 : f32 to vector<8x8xf32>
    %69 = arith.subf %68, %67 : vector<8x8xf32>
    %70 = tpu.concatenate %69, %66 in 1 : vector<8x8xf32>, vector<8x8xf32> -> vector<8x16xf32>
    %71 = arith.mulf %70, %18 : vector<8x16xf32>
    %72 = arith.addf %65, %71 : vector<8x16xf32>
    %73 = vector.extract_strided_slice %23 {offsets = [0, 16], sizes = [8, 16], strides = [1, 1]} : vector<8x32xf32> to vector<8x16xf32>
    %c1 = arith.constant 1 : index
    %c0_30 = arith.constant 0 : index
    %c0_31 = arith.constant 0 : index
    %74 = vector.load %arg16[%c1, %c0_30, %c0_31] : memref<2x8x16xf32, #tpu.memory_space<vmem>>, vector<1x8x16xf32>
    %75 = vector.shape_cast %74 : vector<1x8x16xf32> to vector<8x16xf32>
    %76 = vector.shape_cast %72 : vector<8x16xf32> to vector<1x8x16xf32>
    tpu.vector_store %arg16[%c1, %c0_30, %c0_31], %76 {strides = array<i32>} : memref<2x8x16xf32, #tpu.memory_space<vmem>>, vector<1x8x16xf32>,
    %c1_32 = arith.constant 1 : index
    %c0_33 = arith.constant 0 : index
    %c0_34 = arith.constant 0 : index
    %77 = vector.load %arg17[%c1_32, %c0_33, %c0_34] : memref<2x8x16xf32, #tpu.memory_space<vmem>>, vector<1x8x16xf32>
    %78 = vector.shape_cast %77 : vector<1x8x16xf32> to vector<8x16xf32>
    %79 = vector.shape_cast %73 : vector<8x16xf32> to vector<1x8x16xf32>
    tpu.vector_store %arg17[%c1_32, %c0_33, %c0_34], %79 {strides = array<i32>} : memref<2x8x16xf32, #tpu.memory_space<vmem>>, vector<1x8x16xf32>,
    %c0_35 = arith.constant 0 : index
    %c0_36 = arith.constant 0 : index
    %80 = vector.load %arg8[%c0_35, %c0_36] : memref<8x8xf32, #tpu.memory_space<vmem>>, vector<8x8xf32>
    %81 = vector.extract_strided_slice %21 {offsets = [0, 0], sizes = [8, 16], strides = [1, 1]} : vector<8x64xf32> to vector<8x16xf32>
    %82 = arith.mulf %81, %81 : vector<8x16xf32>
    %cst_37 = arith.constant dense<0.000000e+00> : vector<8xf32>
    %83 = vector.multi_reduction <add>, %82, %cst_37 [1] : vector<8x16xf32> to vector<8xf32>
    %84 = vector.shape_cast %83 : vector<8xf32> to vector<8x1xf32>
    %cst_38 = arith.constant 1.600000e+01 : f32
    %85 = vector.broadcast %cst_38 : f32 to vector<8x1xf32>
    %86 = arith.divf %84, %85 : vector<8x1xf32>
    %cst_39 = arith.constant 9.99999997E-7 : f32
    %87 = vector.broadcast %cst_39 : f32 to vector<8x1xf32>
    %88 = arith.addf %86, %87 : vector<8x1xf32>
    %89 = math.rsqrt %88 : vector<8x1xf32>
    %90 = vector.broadcast %89 : vector<8x1xf32> to vector<8x16xf32>
    %91 = arith.mulf %81, %90 : vector<8x16xf32>
    %92 = vector.broadcast %19 : vector<1x16xf32> to vector<8x16xf32>
    %93 = arith.mulf %91, %92 : vector<8x16xf32>
    %94 = arith.mulf %93, %17 : vector<8x16xf32>
    %95 = vector.extract_strided_slice %93 {offsets = [0, 0], sizes = [8, 8], strides = [1, 1]} : vector<8x16xf32> to vector<8x8xf32>
    %96 = vector.extract_strided_slice %93 {offsets = [0, 8], sizes = [8, 8], strides = [1, 1]} : vector<8x16xf32> to vector<8x8xf32>
    %cst_40 = arith.constant 0.000000e+00 : f32
    %97 = vector.broadcast %cst_40 : f32 to vector<8x8xf32>
    %98 = arith.subf %97, %96 : vector<8x8xf32>
    %99 = tpu.concatenate %98, %95 in 1 : vector<8x8xf32>, vector<8x8xf32> -> vector<8x16xf32>
    %100 = arith.mulf %99, %18 : vector<8x16xf32>
    %101 = arith.addf %94, %100 : vector<8x16xf32>
    %cst_41 = arith.constant dense<0.000000e+00> : vector<8x8xf32>
    %102 = tpu.matmul %101, %44, %cst_41 {dimension_numbers = #tpu.dot_dimension_numbers<[1], [1], [0], [0], [0, 0, 1, 0], [], []>} : vector<8x16xf32>, vector<8x16xf32>, vector<8x8xf32> -> vector<8x8xf32>
    %103 = arith.addf %102, %80 : vector<8x8xf32>
    %cst_42 = arith.constant dense<0xFF800000> : vector<8xf32>
    %104 = vector.multi_reduction <maximumf>, %103, %cst_42 [1] : vector<8x8xf32> to vector<8xf32>
    %105 = vector.shape_cast %104 : vector<8xf32> to vector<8x1xf32>
    %106 = vector.broadcast %105 : vector<8x1xf32> to vector<8x8xf32>
    %107 = arith.subf %103, %106 : vector<8x8xf32>
    %108 = math.exp %107 : vector<8x8xf32>
    %cst_43 = arith.constant dense<0.000000e+00> : vector<8xf32>
    %109 = vector.multi_reduction <add>, %108, %cst_43 [1] : vector<8x8xf32> to vector<8xf32>
    %110 = vector.shape_cast %109 : vector<8xf32> to vector<8x1xf32>
    %111 = tpu.reciprocal %110 {approx = true} : vector<8x1xf32> -> vector<8x1xf32>
    %112 = vector.broadcast %111 : vector<8x1xf32> to vector<8x8xf32>
    %113 = arith.mulf %108, %112 : vector<8x8xf32>
    %cst_44 = arith.constant dense<0.000000e+00> : vector<8x16xf32>
    %114 = tpu.matmul %113, %45, %cst_44 {dimension_numbers = #tpu.dot_dimension_numbers<[1], [0], [0], [1], [0, 0, 1, 1], [], []>} : vector<8x8xf32>, vector<8x16xf32>, vector<8x16xf32> -> vector<8x16xf32>
    %115 = vector.extract_strided_slice %21 {offsets = [0, 16], sizes = [8, 16], strides = [1, 1]} : vector<8x64xf32> to vector<8x16xf32>
    %116 = arith.mulf %115, %115 : vector<8x16xf32>
    %cst_45 = arith.constant dense<0.000000e+00> : vector<8xf32>
    %117 = vector.multi_reduction <add>, %116, %cst_45 [1] : vector<8x16xf32> to vector<8xf32>
    %118 = vector.shape_cast %117 : vector<8xf32> to vector<8x1xf32>
    %cst_46 = arith.constant 1.600000e+01 : f32
    %119 = vector.broadcast %cst_46 : f32 to vector<8x1xf32>
    %120 = arith.divf %118, %119 : vector<8x1xf32>
    %cst_47 = arith.constant 9.99999997E-7 : f32
    %121 = vector.broadcast %cst_47 : f32 to vector<8x1xf32>
    %122 = arith.addf %120, %121 : vector<8x1xf32>
    %123 = math.rsqrt %122 : vector<8x1xf32>
    %124 = vector.broadcast %123 : vector<8x1xf32> to vector<8x16xf32>
    %125 = arith.mulf %115, %124 : vector<8x16xf32>
    %126 = vector.broadcast %19 : vector<1x16xf32> to vector<8x16xf32>
    %127 = arith.mulf %125, %126 : vector<8x16xf32>
    %128 = arith.mulf %127, %17 : vector<8x16xf32>
    %129 = vector.extract_strided_slice %127 {offsets = [0, 0], sizes = [8, 8], strides = [1, 1]} : vector<8x16xf32> to vector<8x8xf32>
    %130 = vector.extract_strided_slice %127 {offsets = [0, 8], sizes = [8, 8], strides = [1, 1]} : vector<8x16xf32> to vector<8x8xf32>
    %cst_48 = arith.constant 0.000000e+00 : f32
    %131 = vector.broadcast %cst_48 : f32 to vector<8x8xf32>
    %132 = arith.subf %131, %130 : vector<8x8xf32>
    %133 = tpu.concatenate %132, %129 in 1 : vector<8x8xf32>, vector<8x8xf32> -> vector<8x16xf32>
    %134 = arith.mulf %133, %18 : vector<8x16xf32>
    %135 = arith.addf %128, %134 : vector<8x16xf32>
    %cst_49 = arith.constant dense<0.000000e+00> : vector<8x8xf32>
    %136 = tpu.matmul %135, %44, %cst_49 {dimension_numbers = #tpu.dot_dimension_numbers<[1], [1], [0], [0], [0, 0, 1, 0], [], []>} : vector<8x16xf32>, vector<8x16xf32>, vector<8x8xf32> -> vector<8x8xf32>
    %137 = arith.addf %136, %80 : vector<8x8xf32>
    %cst_50 = arith.constant dense<0xFF800000> : vector<8xf32>
    %138 = vector.multi_reduction <maximumf>, %137, %cst_50 [1] : vector<8x8xf32> to vector<8xf32>
    %139 = vector.shape_cast %138 : vector<8xf32> to vector<8x1xf32>
    %140 = vector.broadcast %139 : vector<8x1xf32> to vector<8x8xf32>
    %141 = arith.subf %137, %140 : vector<8x8xf32>
    %142 = math.exp %141 : vector<8x8xf32>
    %cst_51 = arith.constant dense<0.000000e+00> : vector<8xf32>
    %143 = vector.multi_reduction <add>, %142, %cst_51 [1] : vector<8x8xf32> to vector<8xf32>
    %144 = vector.shape_cast %143 : vector<8xf32> to vector<8x1xf32>
    %145 = tpu.reciprocal %144 {approx = true} : vector<8x1xf32> -> vector<8x1xf32>
    %146 = vector.broadcast %145 : vector<8x1xf32> to vector<8x8xf32>
    %147 = arith.mulf %142, %146 : vector<8x8xf32>
    %cst_52 = arith.constant dense<0.000000e+00> : vector<8x16xf32>
    %148 = tpu.matmul %147, %45, %cst_52 {dimension_numbers = #tpu.dot_dimension_numbers<[1], [0], [0], [1], [0, 0, 1, 1], [], []>} : vector<8x8xf32>, vector<8x16xf32>, vector<8x16xf32> -> vector<8x16xf32>
    %149 = vector.extract_strided_slice %21 {offsets = [0, 32], sizes = [8, 16], strides = [1, 1]} : vector<8x64xf32> to vector<8x16xf32>
    %150 = arith.mulf %149, %149 : vector<8x16xf32>
    %cst_53 = arith.constant dense<0.000000e+00> : vector<8xf32>
    %151 = vector.multi_reduction <add>, %150, %cst_53 [1] : vector<8x16xf32> to vector<8xf32>
    %152 = vector.shape_cast %151 : vector<8xf32> to vector<8x1xf32>
    %cst_54 = arith.constant 1.600000e+01 : f32
    %153 = vector.broadcast %cst_54 : f32 to vector<8x1xf32>
    %154 = arith.divf %152, %153 : vector<8x1xf32>
    %cst_55 = arith.constant 9.99999997E-7 : f32
    %155 = vector.broadcast %cst_55 : f32 to vector<8x1xf32>
    %156 = arith.addf %154, %155 : vector<8x1xf32>
    %157 = math.rsqrt %156 : vector<8x1xf32>
    %158 = vector.broadcast %157 : vector<8x1xf32> to vector<8x16xf32>
    %159 = arith.mulf %149, %158 : vector<8x16xf32>
    %160 = vector.broadcast %19 : vector<1x16xf32> to vector<8x16xf32>
    %161 = arith.mulf %159, %160 : vector<8x16xf32>
    %162 = arith.mulf %161, %17 : vector<8x16xf32>
    %163 = vector.extract_strided_slice %161 {offsets = [0, 0], sizes = [8, 8], strides = [1, 1]} : vector<8x16xf32> to vector<8x8xf32>
    %164 = vector.extract_strided_slice %161 {offsets = [0, 8], sizes = [8, 8], strides = [1, 1]} : vector<8x16xf32> to vector<8x8xf32>
    %cst_56 = arith.constant 0.000000e+00 : f32
    %165 = vector.broadcast %cst_56 : f32 to vector<8x8xf32>
    %166 = arith.subf %165, %164 : vector<8x8xf32>
    %167 = tpu.concatenate %166, %163 in 1 : vector<8x8xf32>, vector<8x8xf32> -> vector<8x16xf32>
    %168 = arith.mulf %167, %18 : vector<8x16xf32>
    %169 = arith.addf %162, %168 : vector<8x16xf32>
    %cst_57 = arith.constant dense<0.000000e+00> : vector<8x8xf32>
    %170 = tpu.matmul %169, %72, %cst_57 {dimension_numbers = #tpu.dot_dimension_numbers<[1], [1], [0], [0], [0, 0, 1, 0], [], []>} : vector<8x16xf32>, vector<8x16xf32>, vector<8x8xf32> -> vector<8x8xf32>
    %171 = arith.addf %170, %80 : vector<8x8xf32>
    %cst_58 = arith.constant dense<0xFF800000> : vector<8xf32>
    %172 = vector.multi_reduction <maximumf>, %171, %cst_58 [1] : vector<8x8xf32> to vector<8xf32>
    %173 = vector.shape_cast %172 : vector<8xf32> to vector<8x1xf32>
    %174 = vector.broadcast %173 : vector<8x1xf32> to vector<8x8xf32>
    %175 = arith.subf %171, %174 : vector<8x8xf32>
    %176 = math.exp %175 : vector<8x8xf32>
    %cst_59 = arith.constant dense<0.000000e+00> : vector<8xf32>
    %177 = vector.multi_reduction <add>, %176, %cst_59 [1] : vector<8x8xf32> to vector<8xf32>
    %178 = vector.shape_cast %177 : vector<8xf32> to vector<8x1xf32>
    %179 = tpu.reciprocal %178 {approx = true} : vector<8x1xf32> -> vector<8x1xf32>
    %180 = vector.broadcast %179 : vector<8x1xf32> to vector<8x8xf32>
    %181 = arith.mulf %176, %180 : vector<8x8xf32>
    %cst_60 = arith.constant dense<0.000000e+00> : vector<8x16xf32>
    %182 = tpu.matmul %181, %73, %cst_60 {dimension_numbers = #tpu.dot_dimension_numbers<[1], [0], [0], [1], [0, 0, 1, 1], [], []>} : vector<8x8xf32>, vector<8x16xf32>, vector<8x16xf32> -> vector<8x16xf32>
    %183 = vector.extract_strided_slice %21 {offsets = [0, 48], sizes = [8, 16], strides = [1, 1]} : vector<8x64xf32> to vector<8x16xf32>
    %184 = arith.mulf %183, %183 : vector<8x16xf32>
    %cst_61 = arith.constant dense<0.000000e+00> : vector<8xf32>
    %185 = vector.multi_reduction <add>, %184, %cst_61 [1] : vector<8x16xf32> to vector<8xf32>
    %186 = vector.shape_cast %185 : vector<8xf32> to vector<8x1xf32>
    %cst_62 = arith.constant 1.600000e+01 : f32
    %187 = vector.broadcast %cst_62 : f32 to vector<8x1xf32>
    %188 = arith.divf %186, %187 : vector<8x1xf32>
    %cst_63 = arith.constant 9.99999997E-7 : f32
    %189 = vector.broadcast %cst_63 : f32 to vector<8x1xf32>
    %190 = arith.addf %188, %189 : vector<8x1xf32>
    %191 = math.rsqrt %190 : vector<8x1xf32>
    %192 = vector.broadcast %191 : vector<8x1xf32> to vector<8x16xf32>
    %193 = arith.mulf %183, %192 : vector<8x16xf32>
    %194 = vector.broadcast %19 : vector<1x16xf32> to vector<8x16xf32>
    %195 = arith.mulf %193, %194 : vector<8x16xf32>
    %196 = arith.mulf %195, %17 : vector<8x16xf32>
    %197 = vector.extract_strided_slice %195 {offsets = [0, 0], sizes = [8, 8], strides = [1, 1]} : vector<8x16xf32> to vector<8x8xf32>
    %198 = vector.extract_strided_slice %195 {offsets = [0, 8], sizes = [8, 8], strides = [1, 1]} : vector<8x16xf32> to vector<8x8xf32>
    %cst_64 = arith.constant 0.000000e+00 : f32
    %199 = vector.broadcast %cst_64 : f32 to vector<8x8xf32>
    %200 = arith.subf %199, %198 : vector<8x8xf32>
    %201 = tpu.concatenate %200, %197 in 1 : vector<8x8xf32>, vector<8x8xf32> -> vector<8x16xf32>
    %202 = arith.mulf %201, %18 : vector<8x16xf32>
    %203 = arith.addf %196, %202 : vector<8x16xf32>
    %cst_65 = arith.constant dense<0.000000e+00> : vector<8x8xf32>
    %204 = tpu.matmul %203, %72, %cst_65 {dimension_numbers = #tpu.dot_dimension_numbers<[1], [1], [0], [0], [0, 0, 1, 0], [], []>} : vector<8x16xf32>, vector<8x16xf32>, vector<8x8xf32> -> vector<8x8xf32>
    %205 = arith.addf %204, %80 : vector<8x8xf32>
    %cst_66 = arith.constant dense<0xFF800000> : vector<8xf32>
    %206 = vector.multi_reduction <maximumf>, %205, %cst_66 [1] : vector<8x8xf32> to vector<8xf32>
    %207 = vector.shape_cast %206 : vector<8xf32> to vector<8x1xf32>
    %208 = vector.broadcast %207 : vector<8x1xf32> to vector<8x8xf32>
    %209 = arith.subf %205, %208 : vector<8x8xf32>
    %210 = math.exp %209 : vector<8x8xf32>
    %cst_67 = arith.constant dense<0.000000e+00> : vector<8xf32>
    %211 = vector.multi_reduction <add>, %210, %cst_67 [1] : vector<8x8xf32> to vector<8xf32>
    %212 = vector.shape_cast %211 : vector<8xf32> to vector<8x1xf32>
    %213 = tpu.reciprocal %212 {approx = true} : vector<8x1xf32> -> vector<8x1xf32>
    %214 = vector.broadcast %213 : vector<8x1xf32> to vector<8x8xf32>
    %215 = arith.mulf %210, %214 : vector<8x8xf32>
    %cst_68 = arith.constant dense<0.000000e+00> : vector<8x16xf32>
    %216 = tpu.matmul %215, %73, %cst_68 {dimension_numbers = #tpu.dot_dimension_numbers<[1], [0], [0], [1], [0, 0, 1, 1], [], []>} : vector<8x8xf32>, vector<8x16xf32>, vector<8x16xf32> -> vector<8x16xf32>
    %217 = tpu.concatenate %114, %148, %182, %216 in 1 : vector<8x16xf32>, vector<8x16xf32>, vector<8x16xf32>, vector<8x16xf32> -> vector<8x64xf32>
    %218 = arith.truncf %217 : vector<8x64xf32> to vector<8x64xbf16>
    %c0_69 = arith.constant 0 : index
    %c0_70 = arith.constant 0 : index
    %219 = vector.load %arg9[%c0_69, %c0_70] : memref<64x64xbf16, #tpu.memory_space<vmem>>, vector<64x64xbf16>
    %cst_71 = arith.constant dense<0.000000e+00> : vector<8x64xf32>
    %220 = tpu.matmul %218, %219, %cst_71 {dimension_numbers = #tpu.dot_dimension_numbers<[1], [0], [0], [1], [0, 0, 1, 1], [], []>} : vector<8x64xbf16>, vector<64x64xbf16>, vector<8x64xf32> -> vector<8x64xf32>
    %221 = arith.mulf %220, %220 : vector<8x64xf32>
    %cst_72 = arith.constant dense<0.000000e+00> : vector<8xf32>
    %222 = vector.multi_reduction <add>, %221, %cst_72 [1] : vector<8x64xf32> to vector<8xf32>
    %223 = vector.shape_cast %222 : vector<8xf32> to vector<8x1xf32>
    %cst_73 = arith.constant 6.400000e+01 : f32
    %224 = vector.broadcast %cst_73 : f32 to vector<8x1xf32>
    %225 = arith.divf %223, %224 : vector<8x1xf32>
    %cst_74 = arith.constant 9.99999997E-7 : f32
    %226 = vector.broadcast %cst_74 : f32 to vector<8x1xf32>
    %227 = arith.addf %225, %226 : vector<8x1xf32>
    %228 = math.rsqrt %227 : vector<8x1xf32>
    %229 = vector.broadcast %228 : vector<8x1xf32> to vector<8x64xf32>
    %230 = arith.mulf %220, %229 : vector<8x64xf32>
    %c0_75 = arith.constant 0 : index
    %c0_76 = arith.constant 0 : index
    %231 = vector.load %arg10[%c0_75, %c0_76] : memref<1x64xf32, #tpu.memory_space<vmem>>, vector<1x64xf32>
    %232 = vector.broadcast %231 : vector<1x64xf32> to vector<8x64xf32>
    %233 = arith.mulf %230, %232 : vector<8x64xf32>
    %234 = arith.addf %0, %233 : vector<8x64xf32>
    %235 = arith.mulf %234, %234 : vector<8x64xf32>
    %cst_77 = arith.constant dense<0.000000e+00> : vector<8xf32>
    %236 = vector.multi_reduction <add>, %235, %cst_77 [1] : vector<8x64xf32> to vector<8xf32>
    %237 = vector.shape_cast %236 : vector<8xf32> to vector<8x1xf32>
    %cst_78 = arith.constant 6.400000e+01 : f32
    %238 = vector.broadcast %cst_78 : f32 to vector<8x1xf32>
    %239 = arith.divf %237, %238 : vector<8x1xf32>
    %cst_79 = arith.constant 9.99999997E-7 : f32
    %240 = vector.broadcast %cst_79 : f32 to vector<8x1xf32>
    %241 = arith.addf %239, %240 : vector<8x1xf32>
    %242 = math.rsqrt %241 : vector<8x1xf32>
    %243 = vector.broadcast %242 : vector<8x1xf32> to vector<8x64xf32>
    %244 = arith.mulf %234, %243 : vector<8x64xf32>
    %c0_80 = arith.constant 0 : index
    %c0_81 = arith.constant 0 : index
    %245 = vector.load %arg11[%c0_80, %c0_81] : memref<1x64xf32, #tpu.memory_space<vmem>>, vector<1x64xf32>
    %246 = vector.broadcast %245 : vector<1x64xf32> to vector<8x64xf32>
    %247 = arith.mulf %244, %246 : vector<8x64xf32>
    %248 = arith.truncf %247 : vector<8x64xf32> to vector<8x64xbf16>
    %c0_82 = arith.constant 0 : index
    %c0_83 = arith.constant 0 : index
    %249 = vector.load %arg12[%c0_82, %c0_83] : memref<64x256xbf16, #tpu.memory_space<vmem>>, vector<64x256xbf16>
    %cst_84 = arith.constant dense<0.000000e+00> : vector<8x256xf32>
    %250 = tpu.matmul %248, %249, %cst_84 {dimension_numbers = #tpu.dot_dimension_numbers<[1], [0], [0], [1], [0, 0, 1, 1], [], []>} : vector<8x64xbf16>, vector<64x256xbf16>, vector<8x256xf32> -> vector<8x256xf32>
    %251 = vector.extract_strided_slice %250 {offsets = [0, 0], sizes = [8, 128], strides = [1, 1]} : vector<8x256xf32> to vector<8x128xf32>
    %cst_85 = arith.constant 5.000000e-01 : f32
    %252 = vector.broadcast %cst_85 : f32 to vector<8x128xf32>
    %253 = arith.mulf %252, %251 : vector<8x128xf32>
    %cst_86 = arith.constant 4.471500e-02 : f32
    %254 = vector.broadcast %cst_86 : f32 to vector<8x128xf32>
    %255 = arith.mulf %254, %251 : vector<8x128xf32>
    %256 = arith.mulf %255, %251 : vector<8x128xf32>
    %257 = arith.mulf %256, %251 : vector<8x128xf32>
    %258 = arith.addf %251, %257 : vector<8x128xf32>
    %cst_87 = arith.constant 0.797884583 : f32
    %259 = vector.broadcast %cst_87 : f32 to vector<8x128xf32>
    %260 = arith.mulf %259, %258 : vector<8x128xf32>
    %261 = math.tanh %260 : vector<8x128xf32>
    %cst_88 = arith.constant 1.000000e+00 : f32
    %262 = vector.broadcast %cst_88 : f32 to vector<8x128xf32>
    %263 = arith.addf %262, %261 : vector<8x128xf32>
    %264 = arith.mulf %253, %263 : vector<8x128xf32>
    %265 = vector.extract_strided_slice %250 {offsets = [0, 128], sizes = [8, 128], strides = [1, 1]} : vector<8x256xf32> to vector<8x128xf32>
    %266 = arith.mulf %264, %265 : vector<8x128xf32>
    %267 = arith.truncf %266 : vector<8x128xf32> to vector<8x128xbf16>
    %c0_89 = arith.constant 0 : index
    %c0_90 = arith.constant 0 : index
    %268 = vector.load %arg13[%c0_89, %c0_90] : memref<128x64xbf16, #tpu.memory_space<vmem>>, vector<128x64xbf16>
    %cst_91 = arith.constant dense<0.000000e+00> : vector<8x64xf32>
    %269 = tpu.matmul %267, %268, %cst_91 {dimension_numbers = #tpu.dot_dimension_numbers<[1], [0], [0], [1], [0, 0, 1, 1], [], []>} : vector<8x128xbf16>, vector<128x64xbf16>, vector<8x64xf32> -> vector<8x64xf32>
    %270 = arith.mulf %269, %269 : vector<8x64xf32>
    %cst_92 = arith.constant dense<0.000000e+00> : vector<8xf32>
    %271 = vector.multi_reduction <add>, %270, %cst_92 [1] : vector<8x64xf32> to vector<8xf32>
    %272 = vector.shape_cast %271 : vector<8xf32> to vector<8x1xf32>
    %cst_93 = arith.constant 6.400000e+01 : f32
    %273 = vector.broadcast %cst_93 : f32 to vector<8x1xf32>
    %274 = arith.divf %272, %273 : vector<8x1xf32>
    %cst_94 = arith.constant 9.99999997E-7 : f32
    %275 = vector.broadcast %cst_94 : f32 to vector<8x1xf32>
    %276 = arith.addf %274, %275 : vector<8x1xf32>
    %277 = math.rsqrt %276 : vector<8x1xf32>
    %278 = vector.broadcast %277 : vector<8x1xf32> to vector<8x64xf32>
    %279 = arith.mulf %269, %278 : vector<8x64xf32>
    %c0_95 = arith.constant 0 : index
    %c0_96 = arith.constant 0 : index
    %280 = vector.load %arg14[%c0_95, %c0_96] : memref<1x64xf32, #tpu.memory_space<vmem>>, vector<1x64xf32>
    %281 = vector.broadcast %280 : vector<1x64xf32> to vector<8x64xf32>
    %282 = arith.mulf %279, %281 : vector<8x64xf32>
    %283 = arith.addf %234, %282 : vector<8x64xf32>
    %c0_97 = arith.constant 0 : index
    %c0_98 = arith.constant 0 : index
    %284 = vector.load %arg15[%c0_97, %c0_98] : memref<8x64xf32, #tpu.memory_space<vmem>>, vector<8x64xf32>
    tpu.vector_store %arg15[%c0_97, %c0_98], %283 {strides = array<i32>} : memref<8x64xf32, #tpu.memory_space<vmem>>, vector<8x64xf32>,
    return
  }
  func.func @transform_0(%arg0: i32) -> (i32, i32) {
    %c0_i32 = arith.constant 0 : i32
    %c0_i32_0 = arith.constant 0 : i32
    %c0_i32_1 = arith.constant 0 : i32
    return %c0_i32, %c0_i32_0 : i32, i32
  }
  func.func @transform_1(%arg0: i32) -> (i32, i32) {
    %c0_i32 = arith.constant 0 : i32
    %c0_i32_0 = arith.constant 0 : i32
    %c0_i32_1 = arith.constant 0 : i32
    return %c0_i32, %c0_i32_0 : i32, i32
  }
  func.func @transform_2(%arg0: i32) -> (i32, i32) {
    %c0_i32 = arith.constant 0 : i32
    %c0_i32_0 = arith.constant 0 : i32
    %c0_i32_1 = arith.constant 0 : i32
    return %c0_i32, %c0_i32_0 : i32, i32
  }
  func.func @transform_3(%arg0: i32) -> (i32, i32) {
    %c0_i32 = arith.constant 0 : i32
    %c0_i32_0 = arith.constant 0 : i32
    %c0_i32_1 = arith.constant 0 : i32
    return %c0_i32, %c0_i32_0 : i32, i32
  }
  func.func @transform_4(%arg0: i32) -> (i32, i32) {
    %c0_i32 = arith.constant 0 : i32
    %c0_i32_0 = arith.constant 0 : i32
    %c0_i32_1 = arith.constant 0 : i32
    return %c0_i32, %c0_i32_0 : i32, i32
  }
  func.func @transform_5(%arg0: i32) -> (i32, i32) {
    %c0_i32 = arith.constant 0 : i32
    %c0_i32_0 = arith.constant 0 : i32
    %c0_i32_1 = arith.constant 0 : i32
    return %c0_i32, %c0_i32_0 : i32, i32
  }
  func.func @transform_6(%arg0: i32) -> (i32, i32) {
    %c0_i32 = arith.constant 0 : i32
    %c0_i32_0 = arith.constant 0 : i32
    %c0_i32_1 = arith.constant 0 : i32
    return %c0_i32, %c0_i32_0 : i32, i32
  }
  func.func @transform_7(%arg0: i32) -> (i32, i32) {
    %c0_i32 = arith.constant 0 : i32
    %c0_i32_0 = arith.constant 0 : i32
    %c0_i32_1 = arith.constant 0 : i32
    return %c0_i32, %c0_i32_0 : i32, i32
  }
  func.func @transform_8(%arg0: i32) -> (i32, i32) {
    %c0_i32 = arith.constant 0 : i32
    %c0_i32_0 = arith.constant 0 : i32
    %c0_i32_1 = arith.constant 0 : i32
    return %c0_i32, %c0_i32_0 : i32, i32
  }
  func.func @transform_9(%arg0: i32) -> (i32, i32) {
    %c0_i32 = arith.constant 0 : i32
    %c0_i32_0 = arith.constant 0 : i32
    %c0_i32_1 = arith.constant 0 : i32
    return %c0_i32, %c0_i32_0 : i32, i32
  }
  func.func @transform_10(%arg0: i32) -> (i32, i32) {
    %c0_i32 = arith.constant 0 : i32
    %c0_i32_0 = arith.constant 0 : i32
    %c0_i32_1 = arith.constant 0 : i32
    return %c0_i32, %c0_i32_0 : i32, i32
  }
  func.func @transform_11(%arg0: i32) -> (i32, i32) {
    %c0_i32 = arith.constant 0 : i32
    %c0_i32_0 = arith.constant 0 : i32
    %c0_i32_1 = arith.constant 0 : i32
    return %c0_i32, %c0_i32_0 : i32, i32
  }
  func.func @transform_12(%arg0: i32) -> (i32, i32) {
    %c0_i32 = arith.constant 0 : i32
    %c0_i32_0 = arith.constant 0 : i32
    %c0_i32_1 = arith.constant 0 : i32
    return %c0_i32, %c0_i32_0 : i32, i32
  }
  func.func @transform_13(%arg0: i32) -> (i32, i32) {
    %c0_i32 = arith.constant 0 : i32
    %c0_i32_0 = arith.constant 0 : i32
    %c0_i32_1 = arith.constant 0 : i32
    return %c0_i32, %c0_i32_0 : i32, i32
  }
  func.func @transform_14(%arg0: i32) -> (i32, i32) {
    %c0_i32 = arith.constant 0 : i32
    %c0_i32_0 = arith.constant 0 : i32
    %c0_i32_1 = arith.constant 0 : i32
    return %c0_i32, %c0_i32_0 : i32, i32
  }
  func.func @transform_15(%arg0: i32) -> (i32, i32, i32) {
    %c0_i32 = arith.constant 0 : i32
    %c0_i32_0 = arith.constant 0 : i32
    %c0_i32_1 = arith.constant 0 : i32
    %c0_i32_2 = arith.constant 0 : i32
    return %c0_i32, %c0_i32_0, %c0_i32_1 : i32, i32, i32
  }
  func.func @transform_16(%arg0: i32) -> (i32, i32, i32) {
    %c0_i32 = arith.constant 0 : i32
    %c0_i32_0 = arith.constant 0 : i32
    %c0_i32_1 = arith.constant 0 : i32
    %c0_i32_2 = arith.constant 0 : i32
    return %c0_i32, %c0_i32_0, %c0_i32_1 : i32, i32, i32
  }
}

</mosaic_0001>

<llo_original>
// kernel: _forward.5
$region0: #{_forward.5}
  #allocation0 [shape = 'u32[]', space=smem, size = 0x4, offset = 0x4, fixed_abs, tag = 'smem constant byte address 0x4 - core index']
  #allocation1 [shape = 'u32[144,128]{1,0:T(1,128)}', space=vmem, size = 0x12000, scoped, tag = 'internal scratch']
  %s0 = inlined_call_operand.vmem [shape: f32[1,64], index: 0, kind: input, shape index: {}]
  %s1 = inlined_call_operand.vmem [shape: f32[1,64], index: 1, kind: input, shape index: {}]
  %s2 = inlined_call_operand.vmem [shape: bf16[64,256], index: 2, kind: input, shape index: {}]
  %s3 = inlined_call_operand.vmem [shape: f32[1,256], index: 3, kind: output, shape index: {}]
  %s4 = sld [smem:[#allocation0]]
  $region22: #{_forward.5} parent=0
    _
  %s6 = ssub.s32 1, %s4
  %s7 = scalar_select 0, %s6, %s4
  // Predicated region
  $region2: #{_forward.5} parent=0 // pred_check
    _
  $region3: #{_forward.5} parent=0 // pred_check_branch
    %9 = sbr.rel (0) target = $region5
  $region4: #{_forward.5} parent=0 // pred_region
    _
  $region5: #{_forward.5} parent=0 // pred_fallthru
    _
  // Predicated region
  $region6: #{_forward.5} parent=0 // pred_check
    _
  $region7: #{_forward.5} parent=0 // pred_check_branch
    %11 = sbr.rel (0) target = $region9
  $region8: #{_forward.5} parent=0 // pred_region
    _
  $region9: #{_forward.5} parent=0 // pred_fallthru
    _
  // Predicated region
  $region10: #{_forward.5} parent=0 // pred_check
    _
  $region11: #{_forward.5} parent=0 // pred_check_branch
    %13 = sbr.rel (0) target = $region13
  $region12: #{_forward.5} parent=0 // pred_region
    _
  $region13: #{_forward.5} parent=0 // pred_fallthru
    _
  %v15 = vld [vmem:[%s0] sm:$0x1]
  %v16 = vmul.f32 %v15, %v15
  %vm17 = vcmask 516096
  %v18 = vsel %vm17, %v16, 0.0
  %19 = vadd.xlane.f32.xlu0 %v18
  %v20 = vpop.xlane.xlu0 %19
  %v21 = vrcp.pop 64.0
  %v22 = vmul.f32 %v20, %v21
  %v23 = vadd.f32 %v22, 1e-06
  %v24 = vrsqrt.pop %v23
  %v25 = vmul.f32 %v15, %v24
  %v26 = vld [vmem:[%s1] sm:$0x1]
  %v27 = vmul.f32 %v25, %v26
  %v28 = vpack.c.bf16 %v27, %v27
  %v29 = vld [vmem:[%s2] sm:$0xff]
  %v30 = vld [vmem:[%s2 + $0x8] sm:$0xff]
  %v31 = vld [vmem:[%s2 + $0x10] sm:$0xff]
  %v32 = vld [vmem:[%s2 + $0x18] sm:$0xff]
  %v33 = vld [vmem:[%s2 + $0x20] sm:$0xff]
  %v34 = vld [vmem:[%s2 + $0x28] sm:$0xff]
  %v35 = vld [vmem:[%s2 + $0x30] sm:$0xff]
  %v36 = vld [vmem:[%s2 + $0x38] sm:$0xff]
  %v45 = vunpack.c.l.b16 %v29
  %v46 = vunpack.c.h.b16 %v29
  %v47 = vunpack.c.l.b16 %v30
  %v48 = vunpack.c.h.b16 %v30
  %v49 = vunpack.c.l.b16 %v31
  %v50 = vunpack.c.h.b16 %v31
  %v51 = vunpack.c.l.b16 %v32
  %v52 = vunpack.c.h.b16 %v32
  %v53 = vunpack.c.l.b16 %v33
  %v54 = vunpack.c.h.b16 %v33
  %v55 = vunpack.c.l.b16 %v34
  %v56 = vunpack.c.h.b16 %v34
  %v57 = vunpack.c.l.b16 %v35
  %v58 = vunpack.c.h.b16 %v35
  %v59 = vunpack.c.l.b16 %v36
  %v60 = vunpack.c.h.b16 %v36
  %v61 = vpack.c.b16 %v47, %v45
  %v62 = vpack.c.b16 %v48, %v46
  %v63 = vpack.c.b16 %v51, %v49
  %v64 = vpack.c.b16 %v52, %v50
  %v65 = vpack.c.b16 %v55, %v53
  %v66 = vpack.c.b16 %v56, %v54
  %v67 = vpack.c.b16 %v59, %v57
  %v68 = vpack.c.b16 %v60, %v58
  %vm77 = vcmask 523264
  %v79 = vsel %vm77, %v28, 0
  %81 = vmatprep.subr.bf16.mxu0 %v62
  %82 = vmatpush1.bf16.msra.mxu0 %v61
  %83 = vmatprep.subr.bf16.mxu0 %v64
  %84 = vmatpush1.bf16.msra.mxu0 %v63
  %85 = vmatprep.subr.bf16.mxu0 %v66
  %86 = vmatpush1.bf16.msra.mxu0 %v65
  %87 = vmatprep.subr.bf16.mxu0 %v68
  %88 = vmatpush1.bf16.msra.mxu0 %v67
  %89 = vmatprep.subr.bf16.mxu0 0
  %90 = vmatpush1.bf16.msra.mxu0 0
  %91 = vmatprep.subr.bf16.mxu0 0
  %92 = vmatpush1.bf16.msra.mxu0 0
  %93 = vmatprep.subr.bf16.mxu0 0
  %94 = vmatpush1.bf16.msra.mxu0 0
  %95 = vmatprep.subr.bf16.mxu0 0
  %96 = vmatpush1.bf16.msra.mxu0 0
  %97 = vmatprep.subr.bf16.mxu0 0
  %98 = vmatpush1.bf16.msra.mxu0 0
  %99 = vmatprep.subr.bf16.mxu0 0
  %100 = vmatpush1.bf16.msra.mxu0 0
  %101 = vmatprep.subr.bf16.mxu0 0
  %102 = vmatpush1.bf16.msra.mxu0 0
  %103 = vmatprep.subr.bf16.mxu0 0
  %104 = vmatpush1.bf16.msra.mxu0 0
  %105 = vmatprep.subr.bf16.mxu0 0
  %106 = vmatpush1.bf16.msra.mxu0 0
  %107 = vmatprep.subr.bf16.mxu0 0
  %108 = vmatpush1.bf16.msra.mxu0 0
  %109 = vmatprep.subr.bf16.mxu0 0
  %110 = vmatpush1.bf16.msra.mxu0 0
  %111 = vmatprep.subr.bf16.mxu0 0
  %112 = vmatpush1.bf16.msra.mxu0 0
  %113 = vmatprep.mubr.bf16.mxu0 0
  %114 = vmatmul.mubr.bf16.gmra.mrb[0].mxu0 %v79
  %v115 = vpop.f32.mrb[0].mxu0
  %v116 = vadd.f32 0.0, %v115
  %v117 = vpop.f32.mrb[0].mxu0
  %v118 = vadd.f32 0.0, %v117
  %v119 = vpop.f32.mrb[0].mxu0
  %v120 = vpop.f32.mrb[0].mxu0
  %121 = vdwg.mxu0
  %v124 = vcombine.low %v116, %v118
  %v126 = vunpack.c.l.s4 1966171168
  %v127 = vunpack.c.0.s8 %v126
  %v128 = vlaneseq
  %v129 = vshrl.u32 %v128, 7
  %v130 = vsub.s32 %v127, %v129
  %v131 = vrot.slane %v124, %v130
  %v133 = vunpack.c.l.s4 1966171168
  %v134 = vunpack.c.0.s8 %v133
  %v135 = vlaneseq
  %v136 = vshrl.u32 %v135, 7
  %v137 = vsub.s32 %v134, %v136
  %v138 = vrot.slane %v131, %v137
  %v140 = vlaneseq
  %vm141 = vcmp.ge.s32.totalorder %v140, 0
  %vm142 = vcmp.lt.s32.totalorder %v140, 256
  %vm143 = vmand %vm141, %vm142
  %144 = vst.msk [vmem:[%s3] sm:$0x3] %vm143, %v138
  // Predicated region
  $region14: #{_forward.5} parent=0 // pred_check
    _
  $region15: #{_forward.5} parent=0 // pred_check_branch
    %146 = sbr.rel (0) target = $region17
  $region16: #{_forward.5} parent=0 // pred_region
    _
  $region17: #{_forward.5} parent=0 // pred_fallthru
    _
  // Predicated region
  $region18: #{_forward.5} parent=0 // pred_check
    _
  $region19: #{_forward.5} parent=0 // pred_check_branch
    %148 = sbr.rel (0) target = $region21
  $region20: #{_forward.5} parent=0 // pred_region
    _
  $region21: #{_forward.5} parent=0 // pred_fallthru
    _

// kernel: _forward.3
$region0: #{_forward.3}
  #allocation0 [shape = 'u32[]', space=smem, size = 0x4, offset = 0x4, fixed_abs, tag = 'smem constant byte address 0x4 - core index']
  #allocation1 [shape = 'u32[144,128]{1,0:T(1,128)}', space=vmem, size = 0x12000, scoped, tag = 'internal scratch']
  %s0 = inlined_call_operand.vmem [shape: f32[8,64], index: 0, kind: input, shape index: {}]
  %s1 = inlined_call_operand.vmem [shape: f32[1,64], index: 1, kind: input, shape index: {}]
  %s2 = inlined_call_operand.vmem [shape: bf16[64,128], index: 2, kind: input, shape index: {}]
  %s3 = inlined_call_operand.vmem [shape: f32[1,16], index: 3, kind: input, shape index: {}]
  %s4 = inlined_call_operand.vmem [shape: f32[1,16], index: 4, kind: input, shape index: {}]
  %s5 = inlined_call_operand.vmem [shape: f32[8,16], index: 5, kind: input, shape index: {}]
  %s6 = inlined_call_operand.vmem [shape: f32[8,16], index: 6, kind: input, shape index: {}]
  %s7 = inlined_call_operand.vmem [shape: f32[8,8], index: 7, kind: input, shape index: {}]
  %s8 = inlined_call_operand.vmem [shape: bf16[64,64], index: 8, kind: input, shape index: {}]
  %s9 = inlined_call_operand.vmem [shape: f32[1,64], index: 9, kind: input, shape index: {}]
  %s10 = inlined_call_operand.vmem [shape: f32[1,64], index: 10, kind: input, shape index: {}]
  %s11 = inlined_call_operand.vmem [shape: bf16[64,256], index: 11, kind: input, shape index: {}]
  %s12 = inlined_call_operand.vmem [shape: bf16[128,64], index: 12, kind: input, shape index: {}]
  %s13 = inlined_call_operand.vmem [shape: f32[1,64], index: 13, kind: input, shape index: {}]
  %s14 = inlined_call_operand.vmem [shape: f32[8,64], index: 14, kind: output, shape index: {0}]
  %s15 = inlined_call_operand.hbm [shape: f32[2,8,16], index: 15, kind: output, shape index: {1}]
  %s16 = inlined_call_operand.hbm [shape: f32[2,8,16], index: 16, kind: output, shape index: {2}]
  %17 = xla_tuple %s14, %s15, %s16
  %s18 = sld [smem:[#allocation0]]
  $region82: #{_forward.3} parent=0
    _
  %s20 = ssub.s32 1, %s18
  %s21 = scalar_select 0, %s20, %s18
  $region1: #{_forward.3} parent=0
    #allocation2 [shape = 'u8[8192]{0}', space=vmem, size = 0x2000, scoped, tag = 'output window, operand 1, single buffered']
    #allocation3 [shape = 's32[1]{0}', space=sflag, size = 0x4, scoped, tag = 'scoped memory for _forward.3']
    #allocation4 [shape = 'u8[8192]{0}', space=vmem, size = 0x2000, scoped, tag = 'output window, operand 2, single buffered']
    #allocation5 [shape = 's32[1]{0}', space=sflag, size = 0x4, scoped, tag = 'scoped memory for _forward.3']
    %22 = vsyncpa [#allocation3], 0
    %23 = vsyncpa [#allocation5], 0
    // Predicated region
    $region2: #{_forward.3} parent=1 // pred_check
      _
    $region3: #{_forward.3} parent=1 // pred_check_branch
      %25 = sbr.rel (0) target = $region5
    $region4: #{_forward.3} parent=1 // pred_region
      _
    $region5: #{_forward.3} parent=1 // pred_fallthru
      _
    // Predicated region
    $region6: #{_forward.3} parent=1 // pred_check
      _
    $region7: #{_forward.3} parent=1 // pred_check_branch
      %27 = sbr.rel (0) target = $region9
    $region8: #{_forward.3} parent=1 // pred_region
      _
    $region9: #{_forward.3} parent=1 // pred_fallthru
      _
    // Predicated region
    $region10: #{_forward.3} parent=1 // pred_check
      _
    $region11: #{_forward.3} parent=1 // pred_check_branch
      %29 = sbr.rel (0) target = $region13
    $region12: #{_forward.3} parent=1 // pred_region
      _
    $region13: #{_forward.3} parent=1 // pred_fallthru
      _
    // Predicated region
    $region14: #{_forward.3} parent=1 // pred_check
      _
    $region15: #{_forward.3} parent=1 // pred_check_branch
      %31 = sbr.rel (0) target = $region17
    $region16: #{_forward.3} parent=1 // pred_region
      _
    $region17: #{_forward.3} parent=1 // pred_fallthru
      _
    // Predicated region
    $region18: #{_forward.3} parent=1 // pred_check
      _
    $region19: #{_forward.3} parent=1 // pred_check_branch
      %33 = sbr.rel (0) target = $region21
    $region20: #{_forward.3} parent=1 // pred_region
      _
    $region21: #{_forward.3} parent=1 // pred_fallthru
      _
    // Predicated region
    $region22: #{_forward.3} parent=1 // pred_check
      _
    $region23: #{_forward.3} parent=1 // pred_check_branch
      %35 = sbr.rel (0) target = $region25
    $region24: #{_forward.3} parent=1 // pred_region
      _
    $region25: #{_forward.3} parent=1 // pred_fallthru
      _
    // Predicated region
    $region26: #{_forward.3} parent=1 // pred_check
      _
    $region27: #{_forward.3} parent=1 // pred_check_branch
      %37 = sbr.rel (0) target = $region29
    $region28: #{_forward.3} parent=1 // pred_region
      _
    $region29: #{_forward.3} parent=1 // pred_fallthru
      _
    // Predicated region
    $region30: #{_forward.3} parent=1 // pred_check
      _
    $region31: #{_forward.3} parent=1 // pred_check_branch
      %39 = sbr.rel (0) target = $region33
    $region32: #{_forward.3} parent=1 // pred_region
      _
    $region33: #{_forward.3} parent=1 // pred_fallthru
      _
    // Predicated region
    $region34: #{_forward.3} parent=1 // pred_check
      _
    $region35: #{_forward.3} parent=1 // pred_check_branch
      %41 = sbr.rel (0) target = $region37
    $region36: #{_forward.3} parent=1 // pred_region
      _
    $region37: #{_forward.3} parent=1 // pred_fallthru
      _
    // Predicated region
    $region38: #{_forward.3} parent=1 // pred_check
      _
    $region39: #{_forward.3} parent=1 // pred_check_branch
      %43 = sbr.rel (0) target = $region41
    $region40: #{_forward.3} parent=1 // pred_region
      _
    $region41: #{_forward.3} parent=1 // pred_fallthru
      _
    // Predicated region
    $region42: #{_forward.3} parent=1 // pred_check
      _
    $region43: #{_forward.3} parent=1 // pred_check_branch
      %45 = sbr.rel (0) target = $region45
    $region44: #{_forward.3} parent=1 // pred_region
      _
    $region45: #{_forward.3} parent=1 // pred_fallthru
      _
    // Predicated region
    $region46: #{_forward.3} parent=1 // pred_check
      _
    $region47: #{_forward.3} parent=1 // pred_check_branch
      %47 = sbr.rel (0) target = $region49
    $region48: #{_forward.3} parent=1 // pred_region
      _
    $region49: #{_forward.3} parent=1 // pred_fallthru
      _
    // Predicated region
    $region50: #{_forward.3} parent=1 // pred_check
      _
    $region51: #{_forward.3} parent=1 // pred_check_branch
      %49 = sbr.rel (0) target = $region53
    $region52: #{_forward.3} parent=1 // pred_region
      _
    $region53: #{_forward.3} parent=1 // pred_fallthru
      _
    // Predicated region
    $region54: #{_forward.3} parent=1 // pred_check
      _
    $region55: #{_forward.3} parent=1 // pred_check_branch
      %51 = sbr.rel (0) target = $region57
    $region56: #{_forward.3} parent=1 // pred_region
      _
    $region57: #{_forward.3} parent=1 // pred_fallthru
      _
    %v53 = vld [vmem:[%s0] sm:$0xff]
    %v54 = vmul.f32 %v53, %v53
    %vm55 = vcmask 523264
    %v56 = vsel %vm55, %v54, 0.0
    %57 = vadd.xlane.f32.xlu0 %v56
    %v58 = vpop.xlane.xlu0 %57
    %v59 = vrcp.pop 64.0
    %v60 = vmul.f32 %v58, %v59
    %v61 = vadd.f32 %v60, 1e-06
    %v62 = vrsqrt.pop %v61
    %v63 = vmul.f32 %v53, %v62
    %v64 = vld [vmem:[%s1] sm:$0x1]
    %v66 = vlaneseq
    %v67 = vshrl.u32 %v66, 7
    %v68 = vsub.s32 0, %v67
    %v69 = vrot.slane %v64, %v68
    %v71 = vmul.f32 %v63, %v69
    %v72 = vpack.c.bf16 %v71, %v71
    %v73 = vld [vmem:[%s2] sm:$0xf]
    %v74 = vld [vmem:[%s2 + $0x4] sm:$0xf]
    %v75 = vld [vmem:[%s2 + $0x8] sm:$0xf]
    %v76 = vld [vmem:[%s2 + $0xc] sm:$0xf]
    %v77 = vld [vmem:[%s2 + $0x10] sm:$0xf]
    %v78 = vld [vmem:[%s2 + $0x14] sm:$0xf]
    %v79 = vld [vmem:[%s2 + $0x18] sm:$0xf]
    %v80 = vld [vmem:[%s2 + $0x1c] sm:$0xf]
    %v89 = vunpack.c.l.b16 %v73
    %v90 = vunpack.c.l.b16 %v74
    %v91 = vunpack.c.l.b16 %v75
    %v92 = vunpack.c.l.b16 %v76
    %v93 = vunpack.c.l.b16 %v77
    %v94 = vunpack.c.l.b16 %v78
    %v95 = vunpack.c.l.b16 %v79
    %v96 = vunpack.c.l.b16 %v80
    %v97 = vpack.c.b16 %v90, %v89
    %v98 = vpack.c.b16 %v92, %v91
    %v99 = vpack.c.b16 %v94, %v93
    %v100 = vpack.c.b16 %v96, %v95
    %v106 = vsel %vm55, %v72, 0
    %108 = vmatprep.subr.bf16.mxu0 0
    %109 = vmatpush1.bf16.msra.mxu0 %v97
    %110 = vmatprep.subr.bf16.mxu0 0
    %111 = vmatpush1.bf16.msra.mxu0 %v98
    %112 = vmatprep.subr.bf16.mxu0 0
    %113 = vmatpush1.bf16.msra.mxu0 %v99
    %114 = vmatprep.subr.bf16.mxu0 0
    %115 = vmatpush1.bf16.msra.mxu0 %v100
    %116 = vmatprep.subr.bf16.mxu0 0
    %117 = vmatpush1.bf16.msra.mxu0 0
    %118 = vmatprep.subr.bf16.mxu0 0
    %119 = vmatpush1.bf16.msra.mxu0 0
    %120 = vmatprep.subr.bf16.mxu0 0
    %121 = vmatpush1.bf16.msra.mxu0 0
    %122 = vmatprep.subr.bf16.mxu0 0
    %123 = vmatpush1.bf16.msra.mxu0 0
    %124 = vmatprep.subr.bf16.mxu0 0
    %125 = vmatpush1.bf16.msra.mxu0 0
    %126 = vmatprep.subr.bf16.mxu0 0
    %127 = vmatpush1.bf16.msra.mxu0 0
    %128 = vmatprep.subr.bf16.mxu0 0
    %129 = vmatpush1.bf16.msra.mxu0 0
    %130 = vmatprep.subr.bf16.mxu0 0
    %131 = vmatpush1.bf16.msra.mxu0 0
    %132 = vmatprep.subr.bf16.mxu0 0
    %133 = vmatpush1.bf16.msra.mxu0 0
    %134 = vmatprep.subr.bf16.mxu0 0
    %135 = vmatpush1.bf16.msra.mxu0 0
    %136 = vmatprep.subr.bf16.mxu0 0
    %137 = vmatpush1.bf16.msra.mxu0 0
    %138 = vmatprep.subr.bf16.mxu0 0
    %139 = vmatpush1.bf16.msra.mxu0 0
    %140 = vmatprep.mubr.bf16.mxu0 0
    %141 = vmatmul.mubr.bf16.gmra.mrb[0].mxu0 %v106
    %v142 = vpop.f32.mrb[0].mxu0
    %v143 = vadd.f32 0.0, %v142
    %v144 = vpop.f32.mrb[0].mxu0
    %v145 = vpop.f32.mrb[0].mxu0
    %v146 = vpop.f32.mrb[0].mxu0
    %147 = vdwg.mxu0
    %v148 = vld [vmem:[%s5] sm:$0xff]
    %v149 = vld [vmem:[%s6] sm:$0xff]
    %v150 = vld [vmem:[%s3] sm:$0x1]
    %v151 = vld [vmem:[%s4] sm:$0x1]
    %v152 = vmul.f32 %v143, %v143
    %154 = vrot.lane.b32.xlu0 %v152, 64
    %v155 = vpop.permute.xlu0 %154
    %vm157 = vcmask 130048
    %v158 = vsel %vm157, %v155, 0.0
    %159 = vadd.xlane.f32.xlu0 %v158
    %v160 = vpop.xlane.xlu0 %159
    %v161 = vrcp.pop 16.0
    %v162 = vmul.f32 %v160, %v161
    %v163 = vadd.f32 %v162, 1e-06
    %v164 = vrsqrt.pop %v163
    %v165 = vmul.f32 %v143, %v164
    %v167 = vlaneseq
    %v168 = vshrl.u32 %v167, 7
    %v169 = vsub.s32 0, %v168
    %v170 = vrot.slane %v151, %v169
    %171 = vrot.lane.b32.xlu0 %v170, 64
    %v172 = vpop.permute.xlu0 %171
    %v174 = vmul.f32 %v165, %v172
    %176 = vrot.lane.b32.xlu0 %v148, 64
    %v177 = vpop.permute.xlu0 %176
    %v179 = vmul.f32 %v174, %v177
    %v180 = vsub.f32 0.0, %v174
    %182 = vrot.lane.b32.xlu0 %v180, 56
    %v183 = vpop.permute.xlu0 %182
    %186 = vrot.lane.b32.xlu0 %v174, 72
    %v187 = vpop.permute.xlu0 %186
    %vm189 = vcmask 64512
    %v190 = vsel %vm189, %v183, %v187
    %v191 = vmul.f32 %v190, %v149
    %193 = vrot.lane.b32.xlu0 %v191, 64
    %v194 = vpop.permute.xlu0 %193
    %v196 = vadd.f32 %v179, %v194
    %198 = vrot.lane.b32.xlu0 %v196, 64
    %v199 = vpop.permute.xlu0 %198
    %201 = vst.msk [vmem:[#allocation2] sm:$0xff] %vm157, %v199
    %203 = vrot.lane.b32.xlu0 %v143, 32
    %v204 = vpop.permute.xlu0 %203
    %206 = vst.msk [vmem:[#allocation4] sm:$0xff] %vm157, %v204
    %207 = vrot.lane.b32.xlu0 %v152, 48
    %v208 = vpop.permute.xlu0 %207
    %v210 = vsel %vm157, %v208, 0.0
    %211 = vadd.xlane.f32.xlu0 %v210
    %v212 = vpop.xlane.xlu0 %211
    %v213 = vmul.f32 %v212, %v161
    %v214 = vadd.f32 %v213, 1e-06
    %v215 = vrsqrt.pop %v214
    %v216 = vmul.f32 %v143, %v215
    %217 = vrot.lane.b32.xlu0 %v170, 80
    %v218 = vpop.permute.xlu0 %217
    %v220 = vmul.f32 %v216, %v218
    %221 = vrot.lane.b32.xlu0 %v148, 80
    %v222 = vpop.permute.xlu0 %221
    %v224 = vmul.f32 %v220, %v222
    %v225 = vsub.f32 0.0, %v220
    %227 = vrot.lane.b32.xlu0 %v225, 40
    %v228 = vpop.permute.xlu0 %227
    %231 = vrot.lane.b32.xlu0 %v220, 56
    %v232 = vpop.permute.xlu0 %231
    %v234 = vsel %vm189, %v228, %v232
    %v235 = vmul.f32 %v234, %v149
    %237 = vrot.lane.b32.xlu0 %v235, 80
    %v238 = vpop.permute.xlu0 %237
    %v240 = vadd.f32 %v224, %v238
    %242 = vrot.lane.b32.xlu0 %v240, 48
    %v243 = vpop.permute.xlu0 %242
    %s245 = scalar_lea.vmem [#allocation2], 8
    %246 = vst.msk [vmem:[%s245] sm:$0xff] %vm157, %v243
    %247 = vrot.lane.b32.xlu0 %v143, 16
    %v248 = vpop.permute.xlu0 %247
    %s250 = scalar_lea.vmem [#allocation4], 8
    %251 = vst.msk [vmem:[%s250] sm:$0xff] %vm157, %v248
    %v252 = vld [vmem:[%s7] sm:$0xff]
    %v253 = vsel %vm157, %v152, 0.0
    %254 = vadd.xlane.f32.xlu0 %v253
    %v255 = vpop.xlane.xlu0 %254
    %v256 = vmul.f32 %v255, %v161
    %v257 = vadd.f32 %v256, 1e-06
    %v258 = vrsqrt.pop %v257
    %v259 = vmul.f32 %v143, %v258
    %v261 = vlaneseq
    %v262 = vshrl.u32 %v261, 7
    %v263 = vsub.s32 0, %v262
    %v264 = vrot.slane %v150, %v263
    %v266 = vmul.f32 %v259, %v264
    %v267 = vmul.f32 %v266, %v148
    %v268 = vsub.f32 0.0, %v266
    %270 = vrot.lane.b32.xlu0 %v268, 120
    %v271 = vpop.permute.xlu0 %270
    %274 = vrot.lane.b32.xlu0 %v266, 8
    %v275 = vpop.permute.xlu0 %274
    %v277 = vsel %vm189, %v271, %v275
    %v278 = vmul.f32 %v277, %v149
    %v279 = vadd.f32 %v267, %v278
    %v281 = vsel %vm157, %v279, 0
    %v283 = vsel %vm157, %v199, 0
    %285 = vmatprep.subr.mxu0 0.0
    %286 = vmatpush1.xpose.msra.mxu0 %v283
    %287 = vmatprep.subr.mxu0 0.0
    %288 = vmatpush1.xpose.msra.mxu0 0.0
    %289 = vmatprep.subr.mxu0 0.0
    %290 = vmatpush1.xpose.msra.mxu0 0.0
    %291 = vmatprep.subr.mxu0 0.0
    %292 = vmatpush1.xpose.msra.mxu0 0.0
    %293 = vmatprep.subr.mxu0 0.0
    %294 = vmatpush1.xpose.msra.mxu0 0.0
    %295 = vmatprep.subr.mxu0 0.0
    %296 = vmatpush1.xpose.msra.mxu0 0.0
    %297 = vmatprep.subr.mxu0 0.0
    %298 = vmatpush1.xpose.msra.mxu0 0.0
    %299 = vmatprep.subr.mxu0 0.0
    %300 = vmatpush1.xpose.msra.mxu0 0.0
    %301 = vmatprep.subr.mxu0 0.0
    %302 = vmatpush1.xpose.msra.mxu0 0.0
    %303 = vmatprep.subr.mxu0 0.0
    %304 = vmatpush1.xpose.msra.mxu0 0.0
    %305 = vmatprep.subr.mxu0 0.0
    %306 = vmatpush1.xpose.msra.mxu0 0.0
    %307 = vmatprep.subr.mxu0 0.0
    %308 = vmatpush1.xpose.msra.mxu0 0.0
    %309 = vmatprep.subr.mxu0 0.0
    %310 = vmatpush1.xpose.msra.mxu0 0.0
    %311 = vmatprep.subr.mxu0 0.0
    %312 = vmatpush1.xpose.msra.mxu0 0.0
    %313 = vmatprep.subr.mxu0 0.0
    %314 = vmatpush1.xpose.msra.mxu0 0.0
    %315 = vmatprep.subr.mxu0 0.0
    %316 = vmatpush1.xpose.msra.mxu0 0.0
    %317 = vmatprep.subr.mxu0 0.0
    %318 = vmatpush1.xpose.msra.mxu0 0.0
    %319 = vmatprep.subr.mxu0 0.0
    %320 = vmatpush1.xpose.msra.mxu0 0.0
    %321 = vmatprep.subr.mxu0 0.0
    %322 = vmatpush1.xpose.msra.mxu0 0.0
    %323 = vmatprep.subr.mxu0 0.0
    %324 = vmatpush1.xpose.msra.mxu0 0.0
    %325 = vmatprep.subr.mxu0 0.0
    %326 = vmatpush1.xpose.msra.mxu0 0.0
    %327 = vmatprep.subr.mxu0 0.0
    %328 = vmatpush1.xpose.msra.mxu0 0.0
    %329 = vmatprep.subr.mxu0 0.0
    %330 = vmatpush1.xpose.msra.mxu0 0.0
    %331 = vmatprep.subr.mxu0 0.0
    %332 = vmatpush1.xpose.msra.mxu0 0.0
    %333 = vmatprep.subr.mxu0 0.0
    %334 = vmatpush1.xpose.msra.mxu0 0.0
    %335 = vmatprep.subr.mxu0 0.0
    %336 = vmatpush1.xpose.msra.mxu0 0.0
    %337 = vmatprep.subr.mxu0 0.0
    %338 = vmatpush1.xpose.msra.mxu0 0.0
    %339 = vmatprep.subr.mxu0 0.0
    %340 = vmatpush1.xpose.msra.mxu0 0.0
    %341 = vmatprep.subr.mxu0 0.0
    %342 = vmatpush1.xpose.msra.mxu0 0.0
    %343 = vmatprep.subr.mxu0 0.0
    %344 = vmatpush1.xpose.msra.mxu0 0.0
    %345 = vmatprep.subr.mxu0 0.0
    %346 = vmatpush1.xpose.msra.mxu0 0.0
    %347 = vmatprep.subr.mxu0 0.0
    %348 = vmatpush1.xpose.msra.mxu0 0.0
    %349 = vmatprep.mubr.f32.mxu0 0.0
    %350 = vmatmul.mubr.f32.gmra.mrb[0].mxu0 %v281
    %v351 = vpop.f32.mrb[0].mxu0
    %v352 = vadd.f32 %v252, %v351
    %v353 = vpop.f32.mrb[0].mxu0
    %354 = vdwg.mxu0
    %v355 = vsel %vm189, %v352, -inf
    %356 = vmax.xlane.f32.xlu0 %v355
    %v357 = vpop.xlane.xlu0 %356
    %v358 = vsub.f32 %v352, %v357
    %v359 = vmul.f32 %v358, 1.442695
    %v360 = vpow.pop %v359
    %v361 = vsel %vm189, %v360, 0.0
    %362 = vadd.xlane.f32.xlu0 %v361
    %v363 = vpop.xlane.xlu0 %362
    %v364 = vrcp.pop %v363
    %v365 = vmul.f32 %v360, %v364
    %v367 = vsel %vm189, %v365, 0
    %369 = vmatprep.subr.mxu0 0.0
    %370 = vmatpush1.msra.mxu0 %v204
    %371 = vmatprep.subr.mxu0 0.0
    %372 = vmatpush1.msra.mxu0 0.0
    %373 = vmatprep.subr.mxu0 0.0
    %374 = vmatpush1.msra.mxu0 0.0
    %375 = vmatprep.subr.mxu0 0.0
    %376 = vmatpush1.msra.mxu0 0.0
    %377 = vmatprep.subr.mxu0 0.0
    %378 = vmatpush1.msra.mxu0 0.0
    %379 = vmatprep.subr.mxu0 0.0
    %380 = vmatpush1.msra.mxu0 0.0
    %381 = vmatprep.subr.mxu0 0.0
    %382 = vmatpush1.msra.mxu0 0.0
    %383 = vmatprep.subr.mxu0 0.0
    %384 = vmatpush1.msra.mxu0 0.0
    %385 = vmatprep.subr.mxu0 0.0
    %386 = vmatpush1.msra.mxu0 0.0
    %387 = vmatprep.subr.mxu0 0.0
    %388 = vmatpush1.msra.mxu0 0.0
    %389 = vmatprep.subr.mxu0 0.0
    %390 = vmatpush1.msra.mxu0 0.0
    %391 = vmatprep.subr.mxu0 0.0
    %392 = vmatpush1.msra.mxu0 0.0
    %393 = vmatprep.subr.mxu0 0.0
    %394 = vmatpush1.msra.mxu0 0.0
    %395 = vmatprep.subr.mxu0 0.0
    %396 = vmatpush1.msra.mxu0 0.0
    %397 = vmatprep.subr.mxu0 0.0
    %398 = vmatpush1.msra.mxu0 0.0
    %399 = vmatprep.subr.mxu0 0.0
    %400 = vmatpush1.msra.mxu0 0.0
    %401 = vmatprep.subr.mxu0 0.0
    %402 = vmatpush1.msra.mxu0 0.0
    %403 = vmatprep.subr.mxu0 0.0
    %404 = vmatpush1.msra.mxu0 0.0
    %405 = vmatprep.subr.mxu0 0.0
    %406 = vmatpush1.msra.mxu0 0.0
    %407 = vmatprep.subr.mxu0 0.0
    %408 = vmatpush1.msra.mxu0 0.0
    %409 = vmatprep.subr.mxu0 0.0
    %410 = vmatpush1.msra.mxu0 0.0
    %411 = vmatprep.subr.mxu0 0.0
    %412 = vmatpush1.msra.mxu0 0.0
    %413 = vmatprep.subr.mxu0 0.0
    %414 = vmatpush1.msra.mxu0 0.0
    %415 = vmatprep.subr.mxu0 0.0
    %416 = vmatpush1.msra.mxu0 0.0
    %417 = vmatprep.subr.mxu0 0.0
    %418 = vmatpush1.msra.mxu0 0.0
    %419 = vmatprep.subr.mxu0 0.0
    %420 = vmatpush1.msra.mxu0 0.0
    %421 = vmatprep.subr.mxu0 0.0
    %422 = vmatpush1.msra.mxu0 0.0
    %423 = vmatprep.subr.mxu0 0.0
    %424 = vmatpush1.msra.mxu0 0.0
    %425 = vmatprep.subr.mxu0 0.0
    %426 = vmatpush1.msra.mxu0 0.0
    %427 = vmatprep.subr.mxu0 0.0
    %428 = vmatpush1.msra.mxu0 0.0
    %429 = vmatprep.subr.mxu0 0.0
    %430 = vmatpush1.msra.mxu0 0.0
    %431 = vmatprep.subr.mxu0 0.0
    %432 = vmatpush1.msra.mxu0 0.0
    %433 = vmatprep.mubr.f32.mxu0 0.0
    %434 = vmatmul.mubr.f32.gmra.mrb[0].mxu0 %v367
    %v435 = vpop.f32.mrb[0].mxu0
    %v436 = vadd.f32 0.0, %v435
    %v437 = vpop.f32.mrb[0].mxu0
    %438 = vdwg.mxu0
    %439 = vrot.lane.b32.xlu0 %v152, 112
    %v440 = vpop.permute.xlu0 %439
    %v442 = vsel %vm157, %v440, 0.0
    %443 = vadd.xlane.f32.xlu0 %v442
    %v444 = vpop.xlane.xlu0 %443
    %v445 = vmul.f32 %v444, %v161
    %v446 = vadd.f32 %v445, 1e-06
    %v447 = vrsqrt.pop %v446
    %v448 = vmul.f32 %v143, %v447
    %449 = vrot.lane.b32.xlu0 %v264, 16
    %v450 = vpop.permute.xlu0 %449
    %v452 = vmul.f32 %v448, %v450
    %453 = vrot.lane.b32.xlu0 %v148, 16
    %v454 = vpop.permute.xlu0 %453
    %v456 = vmul.f32 %v452, %v454
    %v457 = vsub.f32 0.0, %v452
    %459 = vrot.lane.b32.xlu0 %v457, 104
    %v460 = vpop.permute.xlu0 %459
    %463 = vrot.lane.b32.xlu0 %v452, 120
    %v464 = vpop.permute.xlu0 %463
    %v466 = vsel %vm189, %v460, %v464
    %v467 = vmul.f32 %v466, %v149
    %469 = vrot.lane.b32.xlu0 %v467, 16
    %v470 = vpop.permute.xlu0 %469
    %v472 = vadd.f32 %v456, %v470
    %474 = vrot.lane.b32.xlu0 %v472, 112
    %v475 = vpop.permute.xlu0 %474
    %v476 = vsel %vm157, %v475, 0
    %478 = vmatprep.subr.mxu0 0.0
    %479 = vmatpush1.xpose.msra.mxu0 %v283
    %480 = vmatprep.subr.mxu0 0.0
    %481 = vmatpush1.xpose.msra.mxu0 0.0
    %482 = vmatprep.subr.mxu0 0.0
    %483 = vmatpush1.xpose.msra.mxu0 0.0
    %484 = vmatprep.subr.mxu0 0.0
    %485 = vmatpush1.xpose.msra.mxu0 0.0
    %486 = vmatprep.subr.mxu0 0.0
    %487 = vmatpush1.xpose.msra.mxu0 0.0
    %488 = vmatprep.subr.mxu0 0.0
    %489 = vmatpush1.xpose.msra.mxu0 0.0
    %490 = vmatprep.subr.mxu0 0.0
    %491 = vmatpush1.xpose.msra.mxu0 0.0
    %492 = vmatprep.subr.mxu0 0.0
    %493 = vmatpush1.xpose.msra.mxu0 0.0
    %494 = vmatprep.subr.mxu0 0.0
    %495 = vmatpush1.xpose.msra.mxu0 0.0
    %496 = vmatprep.subr.mxu0 0.0
    %497 = vmatpush1.xpose.msra.mxu0 0.0
    %498 = vmatprep.subr.mxu0 0.0
    %499 = vmatpush1.xpose.msra.mxu0 0.0
    %500 = vmatprep.subr.mxu0 0.0
    %501 = vmatpush1.xpose.msra.mxu0 0.0
    %502 = vmatprep.subr.mxu0 0.0
    %503 = vmatpush1.xpose.msra.mxu0 0.0
    %504 = vmatprep.subr.mxu0 0.0
    %505 = vmatpush1.xpose.msra.mxu0 0.0
    %506 = vmatprep.subr.mxu0 0.0
    %507 = vmatpush1.xpose.msra.mxu0 0.0
    %508 = vmatprep.subr.mxu0 0.0
    %509 = vmatpush1.xpose.msra.mxu0 0.0
    %510 = vmatprep.subr.mxu0 0.0
    %511 = vmatpush1.xpose.msra.mxu0 0.0
    %512 = vmatprep.subr.mxu0 0.0
    %513 = vmatpush1.xpose.msra.mxu0 0.0
    %514 = vmatprep.subr.mxu0 0.0
    %515 = vmatpush1.xpose.msra.mxu0 0.0
    %516 = vmatprep.subr.mxu0 0.0
    %517 = vmatpush1.xpose.msra.mxu0 0.0
    %518 = vmatprep.subr.mxu0 0.0
    %519 = vmatpush1.xpose.msra.mxu0 0.0
    %520 = vmatprep.subr.mxu0 0.0
    %521 = vmatpush1.xpose.msra.mxu0 0.0
    %522 = vmatprep.subr.mxu0 0.0
    %523 = vmatpush1.xpose.msra.mxu0 0.0
    %524 = vmatprep.subr.mxu0 0.0
    %525 = vmatpush1.xpose.msra.mxu0 0.0
    %526 = vmatprep.subr.mxu0 0.0
    %527 = vmatpush1.xpose.msra.mxu0 0.0
    %528 = vmatprep.subr.mxu0 0.0
    %529 = vmatpush1.xpose.msra.mxu0 0.0
    %530 = vmatprep.subr.mxu0 0.0
    %531 = vmatpush1.xpose.msra.mxu0 0.0
    %532 = vmatprep.subr.mxu0 0.0
    %533 = vmatpush1.xpose.msra.mxu0 0.0
    %534 = vmatprep.subr.mxu0 0.0
    %535 = vmatpush1.xpose.msra.mxu0 0.0
    %536 = vmatprep.subr.mxu0 0.0
    %537 = vmatpush1.xpose.msra.mxu0 0.0
    %538 = vmatprep.subr.mxu0 0.0
    %539 = vmatpush1.xpose.msra.mxu0 0.0
    %540 = vmatprep.subr.mxu0 0.0
    %541 = vmatpush1.xpose.msra.mxu0 0.0
    %542 = vmatprep.mubr.f32.mxu0 0.0
    %543 = vmatmul.mubr.f32.gmra.mrb[0].mxu0 %v476
    %v544 = vpop.f32.mrb[0].mxu0
    %v545 = vadd.f32 %v252, %v544
    %v546 = vpop.f32.mrb[0].mxu0
    %547 = vdwg.mxu0
    %v548 = vsel %vm189, %v545, -inf
    %549 = vmax.xlane.f32.xlu0 %v548
    %v550 = vpop.xlane.xlu0 %549
    %v551 = vsub.f32 %v545, %v550
    %v552 = vmul.f32 %v551, 1.442695
    %v553 = vpow.pop %v552
    %v554 = vsel %vm189, %v553, 0.0
    %555 = vadd.xlane.f32.xlu0 %v554
    %v556 = vpop.xlane.xlu0 %555
    %v557 = vrcp.pop %v556
    %v558 = vmul.f32 %v553, %v557
    %v560 = vsel %vm189, %v558, 0
    %562 = vmatprep.subr.mxu0 0.0
    %563 = vmatpush1.msra.mxu0 %v204
    %564 = vmatprep.subr.mxu0 0.0
    %565 = vmatpush1.msra.mxu0 0.0
    %566 = vmatprep.subr.mxu0 0.0
    %567 = vmatpush1.msra.mxu0 0.0
    %568 = vmatprep.subr.mxu0 0.0
    %569 = vmatpush1.msra.mxu0 0.0
    %570 = vmatprep.subr.mxu0 0.0
    %571 = vmatpush1.msra.mxu0 0.0
    %572 = vmatprep.subr.mxu0 0.0
    %573 = vmatpush1.msra.mxu0 0.0
    %574 = vmatprep.subr.mxu0 0.0
    %575 = vmatpush1.msra.mxu0 0.0
    %576 = vmatprep.subr.mxu0 0.0
    %577 = vmatpush1.msra.mxu0 0.0
    %578 = vmatprep.subr.mxu0 0.0
    %579 = vmatpush1.msra.mxu0 0.0
    %580 = vmatprep.subr.mxu0 0.0
    %581 = vmatpush1.msra.mxu0 0.0
    %582 = vmatprep.subr.mxu0 0.0
    %583 = vmatpush1.msra.mxu0 0.0
    %584 = vmatprep.subr.mxu0 0.0
    %585 = vmatpush1.msra.mxu0 0.0
    %586 = vmatprep.subr.mxu0 0.0
    %587 = vmatpush1.msra.mxu0 0.0
    %588 = vmatprep.subr.mxu0 0.0
    %589 = vmatpush1.msra.mxu0 0.0
    %590 = vmatprep.subr.mxu0 0.0
    %591 = vmatpush1.msra.mxu0 0.0
    %592 = vmatprep.subr.mxu0 0.0
    %593 = vmatpush1.msra.mxu0 0.0
    %594 = vmatprep.subr.mxu0 0.0
    %595 = vmatpush1.msra.mxu0 0.0
    %596 = vmatprep.subr.mxu0 0.0
    %597 = vmatpush1.msra.mxu0 0.0
    %598 = vmatprep.subr.mxu0 0.0
    %599 = vmatpush1.msra.mxu0 0.0
    %600 = vmatprep.subr.mxu0 0.0
    %601 = vmatpush1.msra.mxu0 0.0
    %602 = vmatprep.subr.mxu0 0.0
    %603 = vmatpush1.msra.mxu0 0.0
    %604 = vmatprep.subr.mxu0 0.0
    %605 = vmatpush1.msra.mxu0 0.0
    %606 = vmatprep.subr.mxu0 0.0
    %607 = vmatpush1.msra.mxu0 0.0
    %608 = vmatprep.subr.mxu0 0.0
    %609 = vmatpush1.msra.mxu0 0.0
    %610 = vmatprep.subr.mxu0 0.0
    %611 = vmatpush1.msra.mxu0 0.0
    %612 = vmatprep.subr.mxu0 0.0
    %613 = vmatpush1.msra.mxu0 0.0
    %614 = vmatprep.subr.mxu0 0.0
    %615 = vmatpush1.msra.mxu0 0.0
    %616 = vmatprep.subr.mxu0 0.0
    %617 = vmatpush1.msra.mxu0 0.0
    %618 = vmatprep.subr.mxu0 0.0
    %619 = vmatpush1.msra.mxu0 0.0
    %620 = vmatprep.subr.mxu0 0.0
    %621 = vmatpush1.msra.mxu0 0.0
    %622 = vmatprep.subr.mxu0 0.0
    %623 = vmatpush1.msra.mxu0 0.0
    %624 = vmatprep.subr.mxu0 0.0
    %625 = vmatpush1.msra.mxu0 0.0
    %626 = vmatprep.mubr.f32.mxu0 0.0
    %627 = vmatmul.mubr.f32.gmra.mrb[0].mxu0 %v560
    %v628 = vpop.f32.mrb[0].mxu0
    %v629 = vadd.f32 0.0, %v628
    %v630 = vpop.f32.mrb[0].mxu0
    %631 = vdwg.mxu0
    %632 = vrot.lane.b32.xlu0 %v152, 96
    %v633 = vpop.permute.xlu0 %632
    %v635 = vsel %vm157, %v633, 0.0
    %636 = vadd.xlane.f32.xlu0 %v635
    %v637 = vpop.xlane.xlu0 %636
    %v638 = vmul.f32 %v637, %v161
    %v639 = vadd.f32 %v638, 1e-06
    %v640 = vrsqrt.pop %v639
    %v641 = vmul.f32 %v143, %v640
    %642 = vrot.lane.b32.xlu0 %v264, 32
    %v643 = vpop.permute.xlu0 %642
    %v645 = vmul.f32 %v641, %v643
    %646 = vrot.lane.b32.xlu0 %v148, 32
    %v647 = vpop.permute.xlu0 %646
    %v649 = vmul.f32 %v645, %v647
    %v650 = vsub.f32 0.0, %v645
    %652 = vrot.lane.b32.xlu0 %v650, 88
    %v653 = vpop.permute.xlu0 %652
    %656 = vrot.lane.b32.xlu0 %v645, 104
    %v657 = vpop.permute.xlu0 %656
    %v659 = vsel %vm189, %v653, %v657
    %v660 = vmul.f32 %v659, %v149
    %662 = vrot.lane.b32.xlu0 %v660, 32
    %v663 = vpop.permute.xlu0 %662
    %v665 = vadd.f32 %v649, %v663
    %667 = vrot.lane.b32.xlu0 %v665, 96
    %v668 = vpop.permute.xlu0 %667
    %v669 = vsel %vm157, %v668, 0
    %v671 = vsel %vm157, %v243, 0
    %673 = vmatprep.subr.mxu0 0.0
    %674 = vmatpush1.xpose.msra.mxu0 %v671
    %675 = vmatprep.subr.mxu0 0.0
    %676 = vmatpush1.xpose.msra.mxu0 0.0
    %677 = vmatprep.subr.mxu0 0.0
    %678 = vmatpush1.xpose.msra.mxu0 0.0
    %679 = vmatprep.subr.mxu0 0.0
    %680 = vmatpush1.xpose.msra.mxu0 0.0
    %681 = vmatprep.subr.mxu0 0.0
    %682 = vmatpush1.xpose.msra.mxu0 0.0
    %683 = vmatprep.subr.mxu0 0.0
    %684 = vmatpush1.xpose.msra.mxu0 0.0
    %685 = vmatprep.subr.mxu0 0.0
    %686 = vmatpush1.xpose.msra.mxu0 0.0
    %687 = vmatprep.subr.mxu0 0.0
    %688 = vmatpush1.xpose.msra.mxu0 0.0
    %689 = vmatprep.subr.mxu0 0.0
    %690 = vmatpush1.xpose.msra.mxu0 0.0
    %691 = vmatprep.subr.mxu0 0.0
    %692 = vmatpush1.xpose.msra.mxu0 0.0
    %693 = vmatprep.subr.mxu0 0.0
    %694 = vmatpush1.xpose.msra.mxu0 0.0
    %695 = vmatprep.subr.mxu0 0.0
    %696 = vmatpush1.xpose.msra.mxu0 0.0
    %697 = vmatprep.subr.mxu0 0.0
    %698 = vmatpush1.xpose.msra.mxu0 0.0
    %699 = vmatprep.subr.mxu0 0.0
    %700 = vmatpush1.xpose.msra.mxu0 0.0
    %701 = vmatprep.subr.mxu0 0.0
    %702 = vmatpush1.xpose.msra.mxu0 0.0
    %703 = vmatprep.subr.mxu0 0.0
    %704 = vmatpush1.xpose.msra.mxu0 0.0
    %705 = vmatprep.subr.mxu0 0.0
    %706 = vmatpush1.xpose.msra.mxu0 0.0
    %707 = vmatprep.subr.mxu0 0.0
    %708 = vmatpush1.xpose.msra.mxu0 0.0
    %709 = vmatprep.subr.mxu0 0.0
    %710 = vmatpush1.xpose.msra.mxu0 0.0
    %711 = vmatprep.subr.mxu0 0.0
    %712 = vmatpush1.xpose.msra.mxu0 0.0
    %713 = vmatprep.subr.mxu0 0.0
    %714 = vmatpush1.xpose.msra.mxu0 0.0
    %715 = vmatprep.subr.mxu0 0.0
    %716 = vmatpush1.xpose.msra.mxu0 0.0
    %717 = vmatprep.subr.mxu0 0.0
    %718 = vmatpush1.xpose.msra.mxu0 0.0
    %719 = vmatprep.subr.mxu0 0.0
    %720 = vmatpush1.xpose.msra.mxu0 0.0
    %721 = vmatprep.subr.mxu0 0.0
    %722 = vmatpush1.xpose.msra.mxu0 0.0
    %723 = vmatprep.subr.mxu0 0.0
    %724 = vmatpush1.xpose.msra.mxu0 0.0
    %725 = vmatprep.subr.mxu0 0.0
    %726 = vmatpush1.xpose.msra.mxu0 0.0
    %727 = vmatprep.subr.mxu0 0.0
    %728 = vmatpush1.xpose.msra.mxu0 0.0
    %729 = vmatprep.subr.mxu0 0.0
    %730 = vmatpush1.xpose.msra.mxu0 0.0
    %731 = vmatprep.subr.mxu0 0.0
    %732 = vmatpush1.xpose.msra.mxu0 0.0
    %733 = vmatprep.subr.mxu0 0.0
    %734 = vmatpush1.xpose.msra.mxu0 0.0
    %735 = vmatprep.subr.mxu0 0.0
    %736 = vmatpush1.xpose.msra.mxu0 0.0
    %737 = vmatprep.mubr.f32.mxu0 0.0
    %738 = vmatmul.mubr.f32.gmra.mrb[0].mxu0 %v669
    %v739 = vpop.f32.mrb[0].mxu0
    %v740 = vadd.f32 %v252, %v739
    %v741 = vpop.f32.mrb[0].mxu0
    %742 = vdwg.mxu0
    %v743 = vsel %vm189, %v740, -inf
    %744 = vmax.xlane.f32.xlu0 %v743
    %v745 = vpop.xlane.xlu0 %744
    %v746 = vsub.f32 %v740, %v745
    %v747 = vmul.f32 %v746, 1.442695
    %v748 = vpow.pop %v747
    %v749 = vsel %vm189, %v748, 0.0
    %750 = vadd.xlane.f32.xlu0 %v749
    %v751 = vpop.xlane.xlu0 %750
    %v752 = vrcp.pop %v751
    %v753 = vmul.f32 %v748, %v752
    %v755 = vsel %vm189, %v753, 0
    %757 = vmatprep.subr.mxu0 0.0
    %758 = vmatpush1.msra.mxu0 %v248
    %759 = vmatprep.subr.mxu0 0.0
    %760 = vmatpush1.msra.mxu0 0.0
    %761 = vmatprep.subr.mxu0 0.0
    %762 = vmatpush1.msra.mxu0 0.0
    %763 = vmatprep.subr.mxu0 0.0
    %764 = vmatpush1.msra.mxu0 0.0
    %765 = vmatprep.subr.mxu0 0.0
    %766 = vmatpush1.msra.mxu0 0.0
    %767 = vmatprep.subr.mxu0 0.0
    %768 = vmatpush1.msra.mxu0 0.0
    %769 = vmatprep.subr.mxu0 0.0
    %770 = vmatpush1.msra.mxu0 0.0
    %771 = vmatprep.subr.mxu0 0.0
    %772 = vmatpush1.msra.mxu0 0.0
    %773 = vmatprep.subr.mxu0 0.0
    %774 = vmatpush1.msra.mxu0 0.0
    %775 = vmatprep.subr.mxu0 0.0
    %776 = vmatpush1.msra.mxu0 0.0
    %777 = vmatprep.subr.mxu0 0.0
    %778 = vmatpush1.msra.mxu0 0.0
    %779 = vmatprep.subr.mxu0 0.0
    %780 = vmatpush1.msra.mxu0 0.0
    %781 = vmatprep.subr.mxu0 0.0
    %782 = vmatpush1.msra.mxu0 0.0
    %783 = vmatprep.subr.mxu0 0.0
    %784 = vmatpush1.msra.mxu0 0.0
    %785 = vmatprep.subr.mxu0 0.0
    %786 = vmatpush1.msra.mxu0 0.0
    %787 = vmatprep.subr.mxu0 0.0
    %788 = vmatpush1.msra.mxu0 0.0
    %789 = vmatprep.subr.mxu0 0.0
    %790 = vmatpush1.msra.mxu0 0.0
    %791 = vmatprep.subr.mxu0 0.0
    %792 = vmatpush1.msra.mxu0 0.0
    %793 = vmatprep.subr.mxu0 0.0
    %794 = vmatpush1.msra.mxu0 0.0
    %795 = vmatprep.subr.mxu0 0.0
    %796 = vmatpush1.msra.mxu0 0.0
    %797 = vmatprep.subr.mxu0 0.0
    %798 = vmatpush1.msra.mxu0 0.0
    %799 = vmatprep.subr.mxu0 0.0
    %800 = vmatpush1.msra.mxu0 0.0
    %801 = vmatprep.subr.mxu0 0.0
    %802 = vmatpush1.msra.mxu0 0.0
    %803 = vmatprep.subr.mxu0 0.0
    %804 = vmatpush1.msra.mxu0 0.0
    %805 = vmatprep.subr.mxu0 0.0
    %806 = vmatpush1.msra.mxu0 0.0
    %807 = vmatprep.subr.mxu0 0.0
    %808 = vmatpush1.msra.mxu0 0.0
    %809 = vmatprep.subr.mxu0 0.0
    %810 = vmatpush1.msra.mxu0 0.0
    %811 = vmatprep.subr.mxu0 0.0
    %812 = vmatpush1.msra.mxu0 0.0
    %813 = vmatprep.subr.mxu0 0.0
    %814 = vmatpush1.msra.mxu0 0.0
    %815 = vmatprep.subr.mxu0 0.0
    %816 = vmatpush1.msra.mxu0 0.0
    %817 = vmatprep.subr.mxu0 0.0
    %818 = vmatpush1.msra.mxu0 0.0
    %819 = vmatprep.subr.mxu0 0.0
    %820 = vmatpush1.msra.mxu0 0.0
    %821 = vmatprep.mubr.f32.mxu0 0.0
    %822 = vmatmul.mubr.f32.gmra.mrb[0].mxu0 %v755
    %v823 = vpop.f32.mrb[0].mxu0
    %v824 = vadd.f32 0.0, %v823
    %v825 = vpop.f32.mrb[0].mxu0
    %826 = vdwg.mxu0
    %827 = vrot.lane.b32.xlu0 %v152, 80
    %v828 = vpop.permute.xlu0 %827
    %v830 = vsel %vm157, %v828, 0.0
    %831 = vadd.xlane.f32.xlu0 %v830
    %v832 = vpop.xlane.xlu0 %831
    %v833 = vmul.f32 %v832, %v161
    %v834 = vadd.f32 %v833, 1e-06
    %v835 = vrsqrt.pop %v834
    %v836 = vmul.f32 %v143, %v835
    %837 = vrot.lane.b32.xlu0 %v264, 48
    %v838 = vpop.permute.xlu0 %837
    %v840 = vmul.f32 %v836, %v838
    %841 = vrot.lane.b32.xlu0 %v148, 48
    %v842 = vpop.permute.xlu0 %841
    %v844 = vmul.f32 %v840, %v842
    %v845 = vsub.f32 0.0, %v840
    %847 = vrot.lane.b32.xlu0 %v845, 72
    %v848 = vpop.permute.xlu0 %847
    %851 = vrot.lane.b32.xlu0 %v840, 88
    %v852 = vpop.permute.xlu0 %851
    %v854 = vsel %vm189, %v848, %v852
    %v855 = vmul.f32 %v854, %v149
    %857 = vrot.lane.b32.xlu0 %v855, 48
    %v858 = vpop.permute.xlu0 %857
    %v860 = vadd.f32 %v844, %v858
    %862 = vrot.lane.b32.xlu0 %v860, 80
    %v863 = vpop.permute.xlu0 %862
    %v864 = vsel %vm157, %v863, 0
    %866 = vmatprep.subr.mxu0 0.0
    %867 = vmatpush1.xpose.msra.mxu0 %v671
    %868 = vmatprep.subr.mxu0 0.0
    %869 = vmatpush1.xpose.msra.mxu0 0.0
    %870 = vmatprep.subr.mxu0 0.0
    %871 = vmatpush1.xpose.msra.mxu0 0.0
    %872 = vmatprep.subr.mxu0 0.0
    %873 = vmatpush1.xpose.msra.mxu0 0.0
    %874 = vmatprep.subr.mxu0 0.0
    %875 = vmatpush1.xpose.msra.mxu0 0.0
    %876 = vmatprep.subr.mxu0 0.0
    %877 = vmatpush1.xpose.msra.mxu0 0.0
    %878 = vmatprep.subr.mxu0 0.0
    %879 = vmatpush1.xpose.msra.mxu0 0.0
    %880 = vmatprep.subr.mxu0 0.0
    %881 = vmatpush1.xpose.msra.mxu0 0.0
    %882 = vmatprep.subr.mxu0 0.0
    %883 = vmatpush1.xpose.msra.mxu0 0.0
    %884 = vmatprep.subr.mxu0 0.0
    %885 = vmatpush1.xpose.msra.mxu0 0.0
    %886 = vmatprep.subr.mxu0 0.0
    %887 = vmatpush1.xpose.msra.mxu0 0.0
    %888 = vmatprep.subr.mxu0 0.0
    %889 = vmatpush1.xpose.msra.mxu0 0.0
    %890 = vmatprep.subr.mxu0 0.0
    %891 = vmatpush1.xpose.msra.mxu0 0.0
    %892 = vmatprep.subr.mxu0 0.0
    %893 = vmatpush1.xpose.msra.mxu0 0.0
    %894 = vmatprep.subr.mxu0 0.0
    %895 = vmatpush1.xpose.msra.mxu0 0.0
    %896 = vmatprep.subr.mxu0 0.0
    %897 = vmatpush1.xpose.msra.mxu0 0.0
    %898 = vmatprep.subr.mxu0 0.0
    %899 = vmatpush1.xpose.msra.mxu0 0.0
    %900 = vmatprep.subr.mxu0 0.0
    %901 = vmatpush1.xpose.msra.mxu0 0.0
    %902 = vmatprep.subr.mxu0 0.0
    %903 = vmatpush1.xpose.msra.mxu0 0.0
    %904 = vmatprep.subr.mxu0 0.0
    %905 = vmatpush1.xpose.msra.mxu0 0.0
    %906 = vmatprep.subr.mxu0 0.0
    %907 = vmatpush1.xpose.msra.mxu0 0.0
    %908 = vmatprep.subr.mxu0 0.0
    %909 = vmatpush1.xpose.msra.mxu0 0.0
    %910 = vmatprep.subr.mxu0 0.0
    %911 = vmatpush1.xpose.msra.mxu0 0.0
    %912 = vmatprep.subr.mxu0 0.0
    %913 = vmatpush1.xpose.msra.mxu0 0.0
    %914 = vmatprep.subr.mxu0 0.0
    %915 = vmatpush1.xpose.msra.mxu0 0.0
    %916 = vmatprep.subr.mxu0 0.0
    %917 = vmatpush1.xpose.msra.mxu0 0.0
    %918 = vmatprep.subr.mxu0 0.0
    %919 = vmatpush1.xpose.msra.mxu0 0.0
    %920 = vmatprep.subr.mxu0 0.0
    %921 = vmatpush1.xpose.msra.mxu0 0.0
    %922 = vmatprep.subr.mxu0 0.0
    %923 = vmatpush1.xpose.msra.mxu0 0.0
    %924 = vmatprep.subr.mxu0 0.0
    %925 = vmatpush1.xpose.msra.mxu0 0.0
    %926 = vmatprep.subr.mxu0 0.0
    %927 = vmatpush1.xpose.msra.mxu0 0.0
    %928 = vmatprep.subr.mxu0 0.0
    %929 = vmatpush1.xpose.msra.mxu0 0.0
    %930 = vmatprep.mubr.f32.mxu0 0.0
    %931 = vmatmul.mubr.f32.gmra.mrb[0].mxu0 %v864
    %v932 = vpop.f32.mrb[0].mxu0
    %v933 = vadd.f32 %v252, %v932
    %v934 = vpop.f32.mrb[0].mxu0
    %935 = vdwg.mxu0
    %v936 = vsel %vm189, %v933, -inf
    %937 = vmax.xlane.f32.xlu0 %v936
    %v938 = vpop.xlane.xlu0 %937
    %v939 = vsub.f32 %v933, %v938
    %v940 = vmul.f32 %v939, 1.442695
    %v941 = vpow.pop %v940
    %v942 = vsel %vm189, %v941, 0.0
    %943 = vadd.xlane.f32.xlu0 %v942
    %v944 = vpop.xlane.xlu0 %943
    %v945 = vrcp.pop %v944
    %v946 = vmul.f32 %v941, %v945
    %v948 = vsel %vm189, %v946, 0
    %950 = vmatprep.subr.mxu0 0.0
    %951 = vmatpush1.msra.mxu0 %v248
    %952 = vmatprep.subr.mxu0 0.0
    %953 = vmatpush1.msra.mxu0 0.0
    %954 = vmatprep.subr.mxu0 0.0
    %955 = vmatpush1.msra.mxu0 0.0
    %956 = vmatprep.subr.mxu0 0.0
    %957 = vmatpush1.msra.mxu0 0.0
    %958 = vmatprep.subr.mxu0 0.0
    %959 = vmatpush1.msra.mxu0 0.0
    %960 = vmatprep.subr.mxu0 0.0
    %961 = vmatpush1.msra.mxu0 0.0
    %962 = vmatprep.subr.mxu0 0.0
    %963 = vmatpush1.msra.mxu0 0.0
    %964 = vmatprep.subr.mxu0 0.0
    %965 = vmatpush1.msra.mxu0 0.0
    %966 = vmatprep.subr.mxu0 0.0
    %967 = vmatpush1.msra.mxu0 0.0
    %968 = vmatprep.subr.mxu0 0.0
    %969 = vmatpush1.msra.mxu0 0.0
    %970 = vmatprep.subr.mxu0 0.0
    %971 = vmatpush1.msra.mxu0 0.0
    %972 = vmatprep.subr.mxu0 0.0
    %973 = vmatpush1.msra.mxu0 0.0
    %974 = vmatprep.subr.mxu0 0.0
    %975 = vmatpush1.msra.mxu0 0.0
    %976 = vmatprep.subr.mxu0 0.0
    %977 = vmatpush1.msra.mxu0 0.0
    %978 = vmatprep.subr.mxu0 0.0
    %979 = vmatpush1.msra.mxu0 0.0
    %980 = vmatprep.subr.mxu0 0.0
    %981 = vmatpush1.msra.mxu0 0.0
    %982 = vmatprep.subr.mxu0 0.0
    %983 = vmatpush1.msra.mxu0 0.0
    %984 = vmatprep.subr.mxu0 0.0
    %985 = vmatpush1.msra.mxu0 0.0
    %986 = vmatprep.subr.mxu0 0.0
    %987 = vmatpush1.msra.mxu0 0.0
    %988 = vmatprep.subr.mxu0 0.0
    %989 = vmatpush1.msra.mxu0 0.0
    %990 = vmatprep.subr.mxu0 0.0
    %991 = vmatpush1.msra.mxu0 0.0
    %992 = vmatprep.subr.mxu0 0.0
    %993 = vmatpush1.msra.mxu0 0.0
    %994 = vmatprep.subr.mxu0 0.0
    %995 = vmatpush1.msra.mxu0 0.0
    %996 = vmatprep.subr.mxu0 0.0
    %997 = vmatpush1.msra.mxu0 0.0
    %998 = vmatprep.subr.mxu0 0.0
    %999 = vmatpush1.msra.mxu0 0.0
    %1000 = vmatprep.subr.mxu0 0.0
    %1001 = vmatpush1.msra.mxu0 0.0
    %1002 = vmatprep.subr.mxu0 0.0
    %1003 = vmatpush1.msra.mxu0 0.0
    %1004 = vmatprep.subr.mxu0 0.0
    %1005 = vmatpush1.msra.mxu0 0.0
    %1006 = vmatprep.subr.mxu0 0.0
    %1007 = vmatpush1.msra.mxu0 0.0
    %1008 = vmatprep.subr.mxu0 0.0
    %1009 = vmatpush1.msra.mxu0 0.0
    %1010 = vmatprep.subr.mxu0 0.0
    %1011 = vmatpush1.msra.mxu0 0.0
    %1012 = vmatprep.subr.mxu0 0.0
    %1013 = vmatpush1.msra.mxu0 0.0
    %1014 = vmatprep.mubr.f32.mxu0 0.0
    %1015 = vmatmul.mubr.f32.gmra.mrb[0].mxu0 %v948
    %v1016 = vpop.f32.mrb[0].mxu0
    %v1017 = vadd.f32 0.0, %v1016
    %v1018 = vpop.f32.mrb[0].mxu0
    %1019 = vdwg.mxu0
    %1021 = vrot.lane.b32.xlu0 %v629, 16
    %v1022 = vpop.permute.xlu0 %1021
    %1025 = vrot.lane.b32.xlu0 %v824, 32
    %v1026 = vpop.permute.xlu0 %1025
    %1029 = vrot.lane.b32.xlu0 %v1017, 48
    %v1030 = vpop.permute.xlu0 %1029
    %v1032 = vsel %vm157, %v436, %v1022
    %vm1033 = vcmask 261120
    %v1034 = vsel %vm1033, %v1032, %v1026
    %vm1035 = vcmask 392192
    %v1036 = vsel %vm1035, %v1034, %v1030
    %v1037 = vpack.c.bf16 %v1036, %v1036
    %v1038 = vld [vmem:[%s8] sm:$0xf]
    %v1039 = vld [vmem:[%s8 + $0x4] sm:$0xf]
    %v1040 = vld [vmem:[%s8 + $0x8] sm:$0xf]
    %v1041 = vld [vmem:[%s8 + $0xc] sm:$0xf]
    %v1042 = vld [vmem:[%s8 + $0x10] sm:$0xf]
    %v1043 = vld [vmem:[%s8 + $0x14] sm:$0xf]
    %v1044 = vld [vmem:[%s8 + $0x18] sm:$0xf]
    %v1045 = vld [vmem:[%s8 + $0x1c] sm:$0xf]
    %v1054 = vunpack.c.l.b16 %v1038
    %v1055 = vunpack.c.l.b16 %v1039
    %v1056 = vunpack.c.l.b16 %v1040
    %v1057 = vunpack.c.l.b16 %v1041
    %v1058 = vunpack.c.l.b16 %v1042
    %v1059 = vunpack.c.l.b16 %v1043
    %v1060 = vunpack.c.l.b16 %v1044
    %v1061 = vunpack.c.l.b16 %v1045
    %v1062 = vpack.c.b16 %v1055, %v1054
    %v1063 = vpack.c.b16 %v1057, %v1056
    %v1064 = vpack.c.b16 %v1059, %v1058
    %v1065 = vpack.c.b16 %v1061, %v1060
    %v1071 = vsel %vm55, %v1037, 0
    %1073 = vmatprep.subr.bf16.mxu0 0
    %1074 = vmatpush1.bf16.msra.mxu0 %v1062
    %1075 = vmatprep.subr.bf16.mxu0 0
    %1076 = vmatpush1.bf16.msra.mxu0 %v1063
    %1077 = vmatprep.subr.bf16.mxu0 0
    %1078 = vmatpush1.bf16.msra.mxu0 %v1064
    %1079 = vmatprep.subr.bf16.mxu0 0
    %1080 = vmatpush1.bf16.msra.mxu0 %v1065
    %1081 = vmatprep.subr.bf16.mxu0 0
    %1082 = vmatpush1.bf16.msra.mxu0 0
    %1083 = vmatprep.subr.bf16.mxu0 0
    %1084 = vmatpush1.bf16.msra.mxu0 0
    %1085 = vmatprep.subr.bf16.mxu0 0
    %1086 = vmatpush1.bf16.msra.mxu0 0
    %1087 = vmatprep.subr.bf16.mxu0 0
    %1088 = vmatpush1.bf16.msra.mxu0 0
    %1089 = vmatprep.subr.bf16.mxu0 0
    %1090 = vmatpush1.bf16.msra.mxu0 0
    %1091 = vmatprep.subr.bf16.mxu0 0
    %1092 = vmatpush1.bf16.msra.mxu0 0
    %1093 = vmatprep.subr.bf16.mxu0 0
    %1094 = vmatpush1.bf16.msra.mxu0 0
    %1095 = vmatprep.subr.bf16.mxu0 0
    %1096 = vmatpush1.bf16.msra.mxu0 0
    %1097 = vmatprep.subr.bf16.mxu0 0
    %1098 = vmatpush1.bf16.msra.mxu0 0
    %1099 = vmatprep.subr.bf16.mxu0 0
    %1100 = vmatpush1.bf16.msra.mxu0 0
    %1101 = vmatprep.subr.bf16.mxu0 0
    %1102 = vmatpush1.bf16.msra.mxu0 0
    %1103 = vmatprep.subr.bf16.mxu0 0
    %1104 = vmatpush1.bf16.msra.mxu0 0
    %1105 = vmatprep.mubr.bf16.mxu0 0
    %1106 = vmatmul.mubr.bf16.gmra.mrb[0].mxu0 %v1071
    %v1107 = vpop.f32.mrb[0].mxu0
    %v1108 = vadd.f32 0.0, %v1107
    %v1109 = vpop.f32.mrb[0].mxu0
    %v1110 = vpop.f32.mrb[0].mxu0
    %v1111 = vpop.f32.mrb[0].mxu0
    %1112 = vdwg.mxu0
    %v1113 = vmul.f32 %v1108, %v1108
    %v1114 = vsel %vm55, %v1113, 0.0
    %1115 = vadd.xlane.f32.xlu0 %v1114
    %v1116 = vpop.xlane.xlu0 %1115
    %v1117 = vmul.f32 %v1116, %v59
    %v1118 = vadd.f32 %v1117, 1e-06
    %v1119 = vrsqrt.pop %v1118
    %v1120 = vmul.f32 %v1108, %v1119
    %v1121 = vld [vmem:[%s9] sm:$0x1]
    %v1123 = vlaneseq
    %v1124 = vshrl.u32 %v1123, 7
    %v1125 = vsub.s32 0, %v1124
    %v1126 = vrot.slane %v1121, %v1125
    %v1128 = vmul.f32 %v1120, %v1126
    %v1129 = vadd.f32 %v53, %v1128
    %v1130 = vmul.f32 %v1129, %v1129
    %v1131 = vsel %vm55, %v1130, 0.0
    %1132 = vadd.xlane.f32.xlu0 %v1131
    %v1133 = vpop.xlane.xlu0 %1132
    %v1134 = vmul.f32 %v1133, %v59
    %v1135 = vadd.f32 %v1134, 1e-06
    %v1136 = vrsqrt.pop %v1135
    %v1137 = vmul.f32 %v1129, %v1136
    %v1138 = vld [vmem:[%s10] sm:$0x1]
    %v1140 = vlaneseq
    %v1141 = vshrl.u32 %v1140, 7
    %v1142 = vsub.s32 0, %v1141
    %v1143 = vrot.slane %v1138, %v1142
    %v1145 = vmul.f32 %v1137, %v1143
    %v1146 = vpack.c.bf16 %v1145, %v1145
    %v1147 = vld [vmem:[%s11] sm:$0xff]
    %v1148 = vld [vmem:[%s11 + $0x8] sm:$0xff]
    %v1149 = vld [vmem:[%s11 + $0x10] sm:$0xff]
    %v1150 = vld [vmem:[%s11 + $0x18] sm:$0xff]
    %v1151 = vld [vmem:[%s11 + $0x20] sm:$0xff]
    %v1152 = vld [vmem:[%s11 + $0x28] sm:$0xff]
    %v1153 = vld [vmem:[%s11 + $0x30] sm:$0xff]
    %v1154 = vld [vmem:[%s11 + $0x38] sm:$0xff]
    %v1163 = vunpack.c.l.b16 %v1147
    %v1164 = vunpack.c.h.b16 %v1147
    %v1165 = vunpack.c.l.b16 %v1148
    %v1166 = vunpack.c.h.b16 %v1148
    %v1167 = vunpack.c.l.b16 %v1149
    %v1168 = vunpack.c.h.b16 %v1149
    %v1169 = vunpack.c.l.b16 %v1150
    %v1170 = vunpack.c.h.b16 %v1150
    %v1171 = vunpack.c.l.b16 %v1151
    %v1172 = vunpack.c.h.b16 %v1151
    %v1173 = vunpack.c.l.b16 %v1152
    %v1174 = vunpack.c.h.b16 %v1152
    %v1175 = vunpack.c.l.b16 %v1153
    %v1176 = vunpack.c.h.b16 %v1153
    %v1177 = vunpack.c.l.b16 %v1154
    %v1178 = vunpack.c.h.b16 %v1154
    %v1179 = vpack.c.b16 %v1165, %v1163
    %v1180 = vpack.c.b16 %v1166, %v1164
    %v1181 = vpack.c.b16 %v1169, %v1167
    %v1182 = vpack.c.b16 %v1170, %v1168
    %v1183 = vpack.c.b16 %v1173, %v1171
    %v1184 = vpack.c.b16 %v1174, %v1172
    %v1185 = vpack.c.b16 %v1177, %v1175
    %v1186 = vpack.c.b16 %v1178, %v1176
    %v1196 = vsel %vm55, %v1146, 0
    %1198 = vmatprep.subr.bf16.mxu0 %v1180
    %1199 = vmatpush1.bf16.msra.mxu0 %v1179
    %1200 = vmatprep.subr.bf16.mxu0 %v1182
    %1201 = vmatpush1.bf16.msra.mxu0 %v1181
    %1202 = vmatprep.subr.bf16.mxu0 %v1184
    %1203 = vmatpush1.bf16.msra.mxu0 %v1183
    %1204 = vmatprep.subr.bf16.mxu0 %v1186
    %1205 = vmatpush1.bf16.msra.mxu0 %v1185
    %1206 = vmatprep.subr.bf16.mxu0 0
    %1207 = vmatpush1.bf16.msra.mxu0 0
    %1208 = vmatprep.subr.bf16.mxu0 0
    %1209 = vmatpush1.bf16.msra.mxu0 0
    %1210 = vmatprep.subr.bf16.mxu0 0
    %1211 = vmatpush1.bf16.msra.mxu0 0
    %1212 = vmatprep.subr.bf16.mxu0 0
    %1213 = vmatpush1.bf16.msra.mxu0 0
    %1214 = vmatprep.subr.bf16.mxu0 0
    %1215 = vmatpush1.bf16.msra.mxu0 0
    %1216 = vmatprep.subr.bf16.mxu0 0
    %1217 = vmatpush1.bf16.msra.mxu0 0
    %1218 = vmatprep.subr.bf16.mxu0 0
    %1219 = vmatpush1.bf16.msra.mxu0 0
    %1220 = vmatprep.subr.bf16.mxu0 0
    %1221 = vmatpush1.bf16.msra.mxu0 0
    %1222 = vmatprep.subr.bf16.mxu0 0
    %1223 = vmatpush1.bf16.msra.mxu0 0
    %1224 = vmatprep.subr.bf16.mxu0 0
    %1225 = vmatpush1.bf16.msra.mxu0 0
    %1226 = vmatprep.subr.bf16.mxu0 0
    %1227 = vmatpush1.bf16.msra.mxu0 0
    %1228 = vmatprep.subr.bf16.mxu0 0
    %1229 = vmatpush1.bf16.msra.mxu0 0
    %1230 = vmatprep.mubr.bf16.mxu0 0
    %1231 = vmatmul.mubr.bf16.gmra.mrb[0].mxu0 %v1196
    %v1232 = vpop.f32.mrb[0].mxu0
    %v1233 = vadd.f32 0.0, %v1232
    %v1234 = vpop.f32.mrb[0].mxu0
    %v1235 = vadd.f32 0.0, %v1234
    %v1236 = vpop.f32.mrb[0].mxu0
    %v1237 = vpop.f32.mrb[0].mxu0
    %1238 = vdwg.mxu0
    %v1239 = vmul.f32 %v1233, 0.5
    %v1240 = vmul.f32 %v1233, 0.044715
    %v1241 = vmul.f32 %v1240, %v1233
    %v1242 = vmul.f32 %v1241, %v1233
    %v1243 = vadd.f32 %v1233, %v1242
    %v1244 = vmul.f32 %v1243, 0.7978846
    %v1245 = vtanh.pop %v1244
    %v1246 = vadd.f32 %v1245, 1.0
    %v1247 = vmul.f32 %v1239, %v1246
    %v1248 = vmul.f32 %v1247, %v1235
    %v1249 = vpack.c.bf16 %v1248, %v1248
    %v1250 = vld [vmem:[%s12] sm:$0xf]
    %v1251 = vld [vmem:[%s12 + $0x4] sm:$0xf]
    %v1252 = vld [vmem:[%s12 + $0x8] sm:$0xf]
    %v1253 = vld [vmem:[%s12 + $0xc] sm:$0xf]
    %v1254 = vld [vmem:[%s12 + $0x10] sm:$0xf]
    %v1255 = vld [vmem:[%s12 + $0x14] sm:$0xf]
    %v1256 = vld [vmem:[%s12 + $0x18] sm:$0xf]
    %v1257 = vld [vmem:[%s12 + $0x1c] sm:$0xf]
    %v1258 = vld [vmem:[%s12 + $0x20] sm:$0xf]
    %v1259 = vld [vmem:[%s12 + $0x24] sm:$0xf]
    %v1260 = vld [vmem:[%s12 + $0x28] sm:$0xf]
    %v1261 = vld [vmem:[%s12 + $0x2c] sm:$0xf]
    %v1262 = vld [vmem:[%s12 + $0x30] sm:$0xf]
    %v1263 = vld [vmem:[%s12 + $0x34] sm:$0xf]
    %v1264 = vld [vmem:[%s12 + $0x38] sm:$0xf]
    %v1265 = vld [vmem:[%s12 + $0x3c] sm:$0xf]
    %v1282 = vunpack.c.l.b16 %v1250
    %v1283 = vunpack.c.l.b16 %v1251
    %v1284 = vunpack.c.l.b16 %v1252
    %v1285 = vunpack.c.l.b16 %v1253
    %v1286 = vunpack.c.l.b16 %v1254
    %v1287 = vunpack.c.l.b16 %v1255
    %v1288 = vunpack.c.l.b16 %v1256
    %v1289 = vunpack.c.l.b16 %v1257
    %v1290 = vunpack.c.l.b16 %v1258
    %v1291 = vunpack.c.l.b16 %v1259
    %v1292 = vunpack.c.l.b16 %v1260
    %v1293 = vunpack.c.l.b16 %v1261
    %v1294 = vunpack.c.l.b16 %v1262
    %v1295 = vunpack.c.l.b16 %v1263
    %v1296 = vunpack.c.l.b16 %v1264
    %v1297 = vunpack.c.l.b16 %v1265
    %v1298 = vpack.c.b16 %v1283, %v1282
    %v1299 = vpack.c.b16 %v1285, %v1284
    %v1300 = vpack.c.b16 %v1287, %v1286
    %v1301 = vpack.c.b16 %v1289, %v1288
    %v1302 = vpack.c.b16 %v1291, %v1290
    %v1303 = vpack.c.b16 %v1293, %v1292
    %v1304 = vpack.c.b16 %v1295, %v1294
    %v1305 = vpack.c.b16 %v1297, %v1296
    %1314 = vmatprep.subr.bf16.mxu0 0
    %1315 = vmatpush1.bf16.msra.mxu0 %v1298
    %1316 = vmatprep.subr.bf16.mxu0 0
    %1317 = vmatpush1.bf16.msra.mxu0 %v1299
    %1318 = vmatprep.subr.bf16.mxu0 0
    %1319 = vmatpush1.bf16.msra.mxu0 %v1300
    %1320 = vmatprep.subr.bf16.mxu0 0
    %1321 = vmatpush1.bf16.msra.mxu0 %v1301
    %1322 = vmatprep.subr.bf16.mxu0 0
    %1323 = vmatpush1.bf16.msra.mxu0 %v1302
    %1324 = vmatprep.subr.bf16.mxu0 0
    %1325 = vmatpush1.bf16.msra.mxu0 %v1303
    %1326 = vmatprep.subr.bf16.mxu0 0
    %1327 = vmatpush1.bf16.msra.mxu0 %v1304
    %1328 = vmatprep.subr.bf16.mxu0 0
    %1329 = vmatpush1.bf16.msra.mxu0 %v1305
    %1330 = vmatprep.subr.bf16.mxu0 0
    %1331 = vmatpush1.bf16.msra.mxu0 0
    %1332 = vmatprep.subr.bf16.mxu0 0
    %1333 = vmatpush1.bf16.msra.mxu0 0
    %1334 = vmatprep.subr.bf16.mxu0 0
    %1335 = vmatpush1.bf16.msra.mxu0 0
    %1336 = vmatprep.subr.bf16.mxu0 0
    %1337 = vmatpush1.bf16.msra.mxu0 0
    %1338 = vmatprep.subr.bf16.mxu0 0
    %1339 = vmatpush1.bf16.msra.mxu0 0
    %1340 = vmatprep.subr.bf16.mxu0 0
    %1341 = vmatpush1.bf16.msra.mxu0 0
    %1342 = vmatprep.subr.bf16.mxu0 0
    %1343 = vmatpush1.bf16.msra.mxu0 0
    %1344 = vmatprep.subr.bf16.mxu0 0
    %1345 = vmatpush1.bf16.msra.mxu0 0
    %1346 = vmatprep.mubr.bf16.mxu0 0
    %1347 = vmatmul.mubr.bf16.gmra.mrb[0].mxu0 %v1249
    %v1348 = vpop.f32.mrb[0].mxu0
    %v1349 = vadd.f32 0.0, %v1348
    %v1350 = vpop.f32.mrb[0].mxu0
    %v1351 = vpop.f32.mrb[0].mxu0
    %v1352 = vpop.f32.mrb[0].mxu0
    %1353 = vdwg.mxu0
    %v1354 = vmul.f32 %v1349, %v1349
    %v1355 = vsel %vm55, %v1354, 0.0
    %1356 = vadd.xlane.f32.xlu0 %v1355
    %v1357 = vpop.xlane.xlu0 %1356
    %v1358 = vmul.f32 %v1357, %v59
    %v1359 = vadd.f32 %v1358, 1e-06
    %v1360 = vrsqrt.pop %v1359
    %v1361 = vmul.f32 %v1349, %v1360
    %v1362 = vld [vmem:[%s13] sm:$0x1]
    %v1364 = vlaneseq
    %v1365 = vshrl.u32 %v1364, 7
    %v1366 = vsub.s32 0, %v1365
    %v1367 = vrot.slane %v1362, %v1366
    %v1369 = vmul.f32 %v1361, %v1367
    %v1370 = vadd.f32 %v1129, %v1369
    %1371 = vst.msk [vmem:[%s14] sm:$0xff] %vm55, %v1370
    // Predicated region
    $region58: #{_forward.3} parent=1 // pred_check
      _
    $region59: #{_forward.3} parent=1 // pred_check_branch
      %1373 = sbr.rel (0) target = $region61
    $region60: #{_forward.3} parent=1 // pred_region
      _
    $region61: #{_forward.3} parent=1 // pred_fallthru
      _
    // Predicated region
    $region62: #{_forward.3} parent=1 // pred_check
      _
    $region63: #{_forward.3} parent=1 // pred_check_branch
      %1375 = sbr.rel (0) target = $region65
    $region64: #{_forward.3} parent=1 // pred_region
      %s1377 = ssub.s32 256, 256
      %1378 = vsyncadd [#allocation3], %s1377
      %s1379 = sshll.u32 [#allocation2], 4
      %s1380 = int_to_ptr.vmem [resolvable:$true] %s1379
      %1385 = dma.vmem_to_hbm [thread:$0]  %s1380, 256, %s15, [#allocation3], 128, 128, 8
    $region65: #{_forward.3} parent=1 // pred_fallthru
      _
    // Predicated region
    $region66: #{_forward.3} parent=1 // pred_check
      _
    $region67: #{_forward.3} parent=1 // pred_check_branch
      %1387 = sbr.rel (0) target = $region69
    $region68: #{_forward.3} parent=1 // pred_region
      %s1389 = ssub.s32 256, 256
      %1390 = vsyncadd [#allocation5], %s1389
      %s1391 = sshll.u32 [#allocation4], 4
      %s1392 = int_to_ptr.vmem [resolvable:$true] %s1391
      %1397 = dma.vmem_to_hbm [thread:$0]  %s1392, 256, %s16, [#allocation5], 128, 128, 8
    $region69: #{_forward.3} parent=1 // pred_fallthru
      _
    // Predicated region
    $region70: #{_forward.3} parent=1 // pred_check
      _
    $region71: #{_forward.3} parent=1 // pred_check_branch
      %1399 = sbr.rel (0) target = $region73
    $region72: #{_forward.3} parent=1 // pred_region
      _
    $region73: #{_forward.3} parent=1 // pred_fallthru
      _
    // Predicated region
    $region74: #{_forward.3} parent=1 // pred_check
      _
    $region75: #{_forward.3} parent=1 // pred_check_branch
      %1401 = sbr.rel (0) target = $region77
    $region76: #{_forward.3} parent=1 // pred_region
      %1402 = dma.done [#allocation3], 256
    $region77: #{_forward.3} parent=1 // pred_fallthru
      _
    // Predicated region
    $region78: #{_forward.3} parent=1 // pred_check
      _
    $region79: #{_forward.3} parent=1 // pred_check_branch
      %1404 = sbr.rel (0) target = $region81
    $region80: #{_forward.3} parent=1 // pred_region
      %1405 = dma.done [#allocation5], 256
    $region81: #{_forward.3} parent=1 // pred_fallthru
      _
    %1406 = vsyncpa [#allocation3], 1
    %1407 = vsyncpa [#allocation5], 1

</llo_original>
